<compile_context>
chip_gen: v5e
topology: v5e:2x2
jax: 0.10.0
libtpu: 0.0.40
codegen_flags: <defaults>
</compile_context>

<pallas_src>
import functools
import math

import jax
import jax.numpy as jnp
from jax.experimental import pallas as pl
from jax.experimental.pallas import tpu as pltpu

_LANE = 128  # vreg lane width; gate blocks and the output head are padded to this


# ----------------------------- Pallas kernel --------------------------------

def _pbs_lstm_kernel(x_ref,                 # (T*B, D_in)   time-major fused input
                     fc1_w, fc1_b,          # (D_in, H), (1, H)
                     w_ih, lstm_b,          # (H, 4*GP), (1, 4*GP)   gate-padded
                     w_hh,                  # (GP, 4*GP)             gate-padded
                     fc2_w, fc2_b,          # (GP, H2), (1, H2)
                     fc3_w, fc3_b,          # (H2, H2), (1, H2)
                     fc4_w, fc4_b,          # (H2, OP), (1, OP)      out-padded
                     y_ref,                 # (T*B, OP)
                     hs_scr,                # (T*B, GP) VMEM scratch
                     *, seq_len, batch):
    GP = w_hh.shape[0]

    # ---- hoisted, time-batched matmuls (MXU LHS has M = T*B rows) ----
    a1 = jnp.maximum(
        jnp.dot(x_ref[...], fc1_w[...], preferred_element_type=jnp.float32)
        + fc1_b[...], 0.0)                                          # (T*B, H)
    gx = (jnp.dot(a1, w_ih[...], preferred_element_type=jnp.float32)
          + lstm_b[...])                                            # (T*B, 4*GP)

    w_hh_v = w_hh[...]                                              # hoist ref read
    h = jnp.zeros((batch, GP), jnp.float32)
    c = jnp.zeros((batch, GP), jnp.float32)

    # ---- serial recurrence: only h @ w_hh + elementwise per step ----
    for t in range(seq_len):                                        # static unroll
        r0 = t * batch
        gates = gx[r0:r0 + batch, :] + jnp.dot(
            h, w_hh_v, preferred_element_type=jnp.float32)          # (B, 4*GP)
        # PyTorch gate order i, f, g, o; slices are full-vreg (128-lane) aligned.
        i_g = jax.nn.sigmoid(gates[:, 0 * GP:1 * GP])
        f_g = jax.nn.sigmoid(gates[:, 1 * GP:2 * GP])
        g_g = jnp.tanh(gates[:, 2 * GP:3 * GP])
        o_g = jax.nn.sigmoid(gates[:, 3 * GP:4 * GP])
        c = f_g * c + i_g * g_g
        h = o_g * jnp.tanh(c)
        hs_scr[r0:r0 + batch, :] = h                                # static-offset store

    # ---- hoisted output head over stacked hidden states ----
    hs = hs_scr[...]                                                # (T*B, GP)
    a2 = jnp.maximum(
        jnp.dot(hs, fc2_w[...], preferred_element_type=jnp.float32) + fc2_b[...], 0.0)
    a3 = jnp.maximum(
        jnp.dot(a2, fc3_w[...], preferred_element_type=jnp.float32) + fc3_b[...], 0.0)
    # single lane-dense (T*B, 128) store
    y_ref[...] = jnp.maximum(
        jnp.dot(a3, fc4_w[...], preferred_element_type=jnp.float32) + fc4_b[...], 0.0)


# ------------------------------ wrapper --------------------------------------

def _pad_gate_cols(w, h, gp):
    """(K, 4h) -> (K, 4*gp): each h-wide gate column block zero-padded to gp lanes."""
    k = w.shape[0]
    out = jnp.zeros((k, 4, gp), jnp.float32)
    out = out.at[:, :, :h].set(w.reshape(k, 4, h))
    return out.reshape(k, 4 * gp)


def player_box_score_lstm_forward(params, x, player_team_ids, opponent_team_ids,
                                  date_ids, country_ids):
    """x: (B, T, input_size) f32; id tensors: (B, T) int32. Returns (B, T, output_size)."""
    # --- glue: embedding lookups + concat (dim=2) stay in plain JAX ---
    pte = jnp.take(params["team_emb"], player_team_ids, axis=0)
    ote = jnp.take(params["team_emb"], opponent_team_ids, axis=0)
    de = jnp.take(params["date_emb"], date_ids, axis=0)
    ce = jnp.take(params["country_emb"], country_ids, axis=0)
    x_cat = jnp.concatenate([x, pte, ote, de, ce], axis=2)          # (B, T, D_in)

    B, T, D_in = x_cat.shape
    H = params["w_hh_T"].shape[0]
    H2 = params["fc2_w_T"].shape[1]
    O = params["fc4_w_T"].shape[1]
    GP = _LANE
    OP = _LANE

    # time-major flatten so step t owns rows [t*B, (t+1)*B)
    x_tm = jnp.transpose(x_cat, (1, 0, 2)).reshape(T * B, D_in).astype(jnp.float32)

    # Pad gate blocks / output head to full 128-lane vregs. Zero columns are
    # free on the MXU; padded hidden lanes stay exactly zero through the
    # recurrence (sigmoid(0)*0 terms), so results are unchanged.
    w_ih_pad = _pad_gate_cols(params["w_ih_T"], H, GP)              # (H, 4*GP)
    lstm_b_pad = _pad_gate_cols(params["lstm_b"], H, GP)            # (1, 4*GP)
    w_hh_pad = jnp.zeros((GP, 4 * GP), jnp.float32).at[:H, :].set(
        _pad_gate_cols(params["w_hh_T"], H, GP))                    # (GP, 4*GP)
    fc2_w_pad = jnp.zeros((GP, H2), jnp.float32).at[:H, :].set(params["fc2_w_T"])
    fc4_w_pad = jnp.zeros((H2, OP), jnp.float32).at[:, :O].set(params["fc4_w_T"])
    fc4_b_pad = jnp.zeros((1, OP), jnp.float32).at[:, :O].set(params["fc4_b"])

    vmem = pl.BlockSpec(memory_space=pltpu.MemorySpace.VMEM)
    y = pl.pallas_call(
        functools.partial(_pbs_lstm_kernel, seq_len=T, batch=B),
        out_shape=jax.ShapeDtypeStruct((T * B, OP), jnp.float32),
        in_specs=[vmem] * 12,
        out_specs=vmem,
        scratch_shapes=[pltpu.VMEM((T * B, GP), jnp.float32)],      # stacked h_t
    )(
        x_tm,
        params["fc1_w_T"], params["fc1_b"],
        w_ih_pad, lstm_b_pad, w_hh_pad,
        fc2_w_pad, params["fc2_b"],
        params["fc3_w_T"], params["fc3_b"],
        fc4_w_pad, fc4_b_pad,
    )
    # back to PyTorch batch_first layout and the real output width
    return jnp.transpose(y.reshape(T, B, OP), (1, 0, 2))[:, :, :O]


# -------------------------- pure-JAX reference -------------------------------

def _reference_forward(params, x, pt_ids, ot_ids, d_ids, c_ids):
    pte = jnp.take(params["team_emb"], pt_ids, axis=0)
    ote = jnp.take(params["team_emb"], ot_ids, axis=0)
    de = jnp.take(params["date_emb"], d_ids, axis=0)
    ce = jnp.take(params["country_emb"], c_ids, axis=0)
    xc = jnp.concatenate([x, pte, ote, de, ce], axis=2)
    a1 = jax.nn.relu(xc @ params["fc1_w_T"] + params["fc1_b"])

    H = params["w_hh_T"].shape[0]
    B = xc.shape[0]

    def step(carry, x_t):
        h, c = carry
        gates = x_t @ params["w_ih_T"] + h @ params["w_hh_T"] + params["lstm_b"]
        i = jax.nn.sigmoid(gates[:, 0:H])
        f = jax.nn.sigmoid(gates[:, H:2 * H])
        g = jnp.tanh(gates[:, 2 * H:3 * H])
        o = jax.nn.sigmoid(gates[:, 3 * H:4 * H])
        c = f * c + i * g
        h = o * jnp.tanh(c)
        return (h, c), h

    h0 = jnp.zeros((B, H), jnp.float32)
    c0 = jnp.zeros((B, H), jnp.float32)
    _, hs = jax.lax.scan(step, (h0, c0), jnp.transpose(a1, (1, 0, 2)))
    hs = jnp.transpose(hs, (1, 0, 2))
    a2 = jax.nn.relu(hs @ params["fc2_w_T"] + params["fc2_b"])
    a3 = jax.nn.relu(a2 @ params["fc3_w_T"] + params["fc3_b"])
    a4 = jax.nn.relu(a3 @ params["fc4_w_T"] + params["fc4_b"])
    return a4


# ------------------------------ param init -----------------------------------

def init_params(key, input_size, team_dim=10, date_dim=10, country_dim=10,
                lstm_hidden_dim=64, max_hidden_size=128, output_size=5):
    MAX_TEAM, MAX_DAYS, MAX_COUNTRY = 30, 367, 82
    d_in = input_size + 2 * team_dim + date_dim + country_dim
    h = lstm_hidden_dim
    h2 = max_hidden_size // 2
    keys = jax.random.split(key, 16)

    def lin(kw, kb, fan_in, fan_out):
        bound = 1.0 / math.sqrt(fan_in)
        w = jax.random.uniform(kw, (fan_out, fan_in), jnp.float32, -bound, bound)
        b = jax.random.uniform(kb, (fan_out,), jnp.float32, -bound, bound)
        return w.T, b.reshape(1, -1)   # pre-transposed for x @ W^T

    fc1_w_T, fc1_b = lin(keys[0], keys[1], d_in, h)
    fc2_w_T, fc2_b = lin(keys[2], keys[3], h, h2)
    fc3_w_T, fc3_b = lin(keys[4], keys[5], h2, h2)
    fc4_w_T, fc4_b = lin(keys[6], keys[7], h2, output_size)

    bound = 1.0 / math.sqrt(h)
    w_ih = jax.random.uniform(keys[8], (4 * h, h), jnp.float32, -bound, bound)
    w_hh = jax.random.uniform(keys[9], (4 * h, h), jnp.float32, -bound, bound)
    b_ih = jax.random.uniform(keys[10], (4 * h,), jnp.float32, -bound, bound)
    b_hh = jax.random.uniform(keys[11], (4 * h,), jnp.float32, -bound, bound)

    return {
        "fc1_w_T": fc1_w_T, "fc1_b": fc1_b,
        "w_ih_T": w_ih.T, "w_hh_T": w_hh.T,
        "lstm_b": (b_ih + b_hh).reshape(1, -1),
        "fc2_w_T": fc2_w_T, "fc2_b": fc2_b,
        "fc3_w_T": fc3_w_T, "fc3_b": fc3_b,
        "fc4_w_T": fc4_w_T, "fc4_b": fc4_b,
        "team_emb": jax.random.normal(keys[12], (MAX_TEAM, team_dim), jnp.float32),
        "date_emb": jax.random.normal(keys[13], (MAX_DAYS, date_dim), jnp.float32),
        "country_emb": jax.random.normal(keys[14], (MAX_COUNTRY, country_dim), jnp.float32),
    }


# --------------------------------- main ---------------------------------------

if __name__ == "__main__":
    B, T = 2, 8
    input_size = 24          # + 2*10 + 10 + 10 = 64 concat features
    key = jax.random.PRNGKey(0)
    k_p, k_x, k1, k2, k3, k4 = jax.random.split(key, 6)

    params = init_params(k_p, input_size)

    x = jax.random.normal(k_x, (B, T, input_size), jnp.float32)
    player_team_ids = jax.random.randint(k1, (B, T), 0, 30, jnp.int32)
    opponent_team_ids = jax.random.randint(k2, (B, T), 0, 30, jnp.int32)
    date_ids = jax.random.randint(k3, (B, T), 0, 367, jnp.int32)
    country_ids = jax.random.randint(k4, (B, T), 0, 82, jnp.int32)

    fwd = jax.jit(functools.partial(player_box_score_lstm_forward, params))
    out = fwd(x, player_team_ids, opponent_team_ids, date_ids, country_ids)
    out = jax.block_until_ready(out)

    ref = _reference_forward(params, x, player_team_ids, opponent_team_ids,
                             date_ids, country_ids)
    assert out.shape == (B, T, 5)
    assert jnp.allclose(out, ref, rtol=1e-3, atol=1e-3), float(jnp.max(jnp.abs(out - ref)))

    print("KERNEL_OK")
</pallas_src>

<mosaic_0001>
module attributes {stable_mosaic.version = 11 : i64} {
  func.func @_pbs_lstm_kernel(%arg0: memref<16x64xf32, #tpu.memory_space<vmem>>, %arg1: memref<64x64xf32, #tpu.memory_space<vmem>>, %arg2: memref<1x64xf32, #tpu.memory_space<vmem>>, %arg3: memref<64x512xf32, #tpu.memory_space<vmem>>, %arg4: memref<1x512xf32, #tpu.memory_space<vmem>>, %arg5: memref<128x512xf32, #tpu.memory_space<vmem>>, %arg6: memref<128x64xf32, #tpu.memory_space<vmem>>, %arg7: memref<1x64xf32, #tpu.memory_space<vmem>>, %arg8: memref<64x64xf32, #tpu.memory_space<vmem>>, %arg9: memref<1x64xf32, #tpu.memory_space<vmem>>, %arg10: memref<64x128xf32, #tpu.memory_space<vmem>>, %arg11: memref<1x128xf32, #tpu.memory_space<vmem>>, %arg12: memref<16x128xf32, #tpu.memory_space<vmem>>, %arg13: memref<16x128xf32, #tpu.memory_space<vmem>>) attributes {dimension_semantics = [], scalar_prefetch = 0 : i64, scratch_operands = 1 : i64, tpu.core_type = #tpu.core_type<tc>} {
    %c0 = arith.constant 0 : index
    %c0_0 = arith.constant 0 : index
    %0 = vector.load %arg0[%c0, %c0_0] : memref<16x64xf32, #tpu.memory_space<vmem>>, vector<16x64xf32>
    %c0_1 = arith.constant 0 : index
    %c0_2 = arith.constant 0 : index
    %1 = vector.load %arg1[%c0_1, %c0_2] : memref<64x64xf32, #tpu.memory_space<vmem>>, vector<64x64xf32>
    %cst = arith.constant dense<0.000000e+00> : vector<16x64xf32>
    %2 = tpu.matmul %0, %1, %cst {dimension_numbers = #tpu.dot_dimension_numbers<[1], [0], [0], [1], [0, 0, 1, 1], [], []>} : vector<16x64xf32>, vector<64x64xf32>, vector<16x64xf32> -> vector<16x64xf32>
    %c0_3 = arith.constant 0 : index
    %c0_4 = arith.constant 0 : index
    %3 = vector.load %arg2[%c0_3, %c0_4] : memref<1x64xf32, #tpu.memory_space<vmem>>, vector<1x64xf32>
    %4 = vector.broadcast %3 : vector<1x64xf32> to vector<16x64xf32>
    %5 = arith.addf %2, %4 : vector<16x64xf32>
    %cst_5 = arith.constant 0.000000e+00 : f32
    %6 = vector.broadcast %cst_5 : f32 to vector<16x64xf32>
    %7 = arith.maximumf %5, %6 : vector<16x64xf32>
    %c0_6 = arith.constant 0 : index
    %c0_7 = arith.constant 0 : index
    %8 = vector.load %arg3[%c0_6, %c0_7] : memref<64x512xf32, #tpu.memory_space<vmem>>, vector<64x512xf32>
    %cst_8 = arith.constant dense<0.000000e+00> : vector<16x512xf32>
    %9 = tpu.matmul %7, %8, %cst_8 {dimension_numbers = #tpu.dot_dimension_numbers<[1], [0], [0], [1], [0, 0, 1, 1], [], []>} : vector<16x64xf32>, vector<64x512xf32>, vector<16x512xf32> -> vector<16x512xf32>
    %c0_9 = arith.constant 0 : index
    %c0_10 = arith.constant 0 : index
    %10 = vector.load %arg4[%c0_9, %c0_10] : memref<1x512xf32, #tpu.memory_space<vmem>>, vector<1x512xf32>
    %11 = vector.broadcast %10 : vector<1x512xf32> to vector<16x512xf32>
    %12 = arith.addf %9, %11 : vector<16x512xf32>
    %c0_11 = arith.constant 0 : index
    %c0_12 = arith.constant 0 : index
    %13 = vector.load %arg5[%c0_11, %c0_12] : memref<128x512xf32, #tpu.memory_space<vmem>>, vector<128x512xf32>
    %cst_13 = arith.constant 0.000000e+00 : f32
    %14 = vector.broadcast %cst_13 : f32 to vector<2x128xf32>
    %cst_14 = arith.constant 0.000000e+00 : f32
    %15 = vector.broadcast %cst_14 : f32 to vector<2x128xf32>
    %16 = vector.extract_strided_slice %12 {offsets = [0, 0], sizes = [2, 512], strides = [1, 1]} : vector<16x512xf32> to vector<2x512xf32>
    %cst_15 = arith.constant dense<0.000000e+00> : vector<2x512xf32>
    %17 = tpu.matmul %14, %13, %cst_15 {dimension_numbers = #tpu.dot_dimension_numbers<[1], [0], [0], [1], [0, 0, 1, 1], [], []>} : vector<2x128xf32>, vector<128x512xf32>, vector<2x512xf32> -> vector<2x512xf32>
    %18 = arith.addf %16, %17 : vector<2x512xf32>
    %19 = vector.extract_strided_slice %18 {offsets = [0, 0], sizes = [2, 128], strides = [1, 1]} : vector<2x512xf32> to vector<2x128xf32>
    %20 = arith.negf %19 : vector<2x128xf32>
    %21 = math.exp %20 : vector<2x128xf32>
    %cst_16 = arith.constant 1.000000e+00 : f32
    %22 = vector.broadcast %cst_16 : f32 to vector<2x128xf32>
    %23 = arith.addf %22, %21 : vector<2x128xf32>
    %24 = arith.divf %22, %23 : vector<2x128xf32>
    %25 = vector.extract_strided_slice %18 {offsets = [0, 128], sizes = [2, 128], strides = [1, 1]} : vector<2x512xf32> to vector<2x128xf32>
    %26 = arith.negf %25 : vector<2x128xf32>
    %27 = math.exp %26 : vector<2x128xf32>
    %cst_17 = arith.constant 1.000000e+00 : f32
    %28 = vector.broadcast %cst_17 : f32 to vector<2x128xf32>
    %29 = arith.addf %28, %27 : vector<2x128xf32>
    %30 = arith.divf %28, %29 : vector<2x128xf32>
    %31 = vector.extract_strided_slice %18 {offsets = [0, 256], sizes = [2, 128], strides = [1, 1]} : vector<2x512xf32> to vector<2x128xf32>
    %32 = math.tanh %31 : vector<2x128xf32>
    %33 = vector.extract_strided_slice %18 {offsets = [0, 384], sizes = [2, 128], strides = [1, 1]} : vector<2x512xf32> to vector<2x128xf32>
    %34 = arith.negf %33 : vector<2x128xf32>
    %35 = math.exp %34 : vector<2x128xf32>
    %cst_18 = arith.constant 1.000000e+00 : f32
    %36 = vector.broadcast %cst_18 : f32 to vector<2x128xf32>
    %37 = arith.addf %36, %35 : vector<2x128xf32>
    %38 = arith.divf %36, %37 : vector<2x128xf32>
    %39 = arith.mulf %30, %15 : vector<2x128xf32>
    %40 = arith.mulf %24, %32 : vector<2x128xf32>
    %41 = arith.addf %39, %40 : vector<2x128xf32>
    %42 = math.tanh %41 : vector<2x128xf32>
    %43 = arith.mulf %38, %42 : vector<2x128xf32>
    %c0_19 = arith.constant 0 : index
    %c0_20 = arith.constant 0 : index
    %44 = vector.load %arg13[%c0_19, %c0_20] : memref<16x128xf32, #tpu.memory_space<vmem>>, vector<2x128xf32>
    tpu.vector_store %arg13[%c0_19, %c0_20], %43 {strides = array<i32>} : memref<16x128xf32, #tpu.memory_space<vmem>>, vector<2x128xf32>,
    %45 = vector.extract_strided_slice %12 {offsets = [2, 0], sizes = [2, 512], strides = [1, 1]} : vector<16x512xf32> to vector<2x512xf32>
    %cst_21 = arith.constant dense<0.000000e+00> : vector<2x512xf32>
    %46 = tpu.matmul %43, %13, %cst_21 {dimension_numbers = #tpu.dot_dimension_numbers<[1], [0], [0], [1], [0, 0, 1, 1], [], []>} : vector<2x128xf32>, vector<128x512xf32>, vector<2x512xf32> -> vector<2x512xf32>
    %47 = arith.addf %45, %46 : vector<2x512xf32>
    %48 = vector.extract_strided_slice %47 {offsets = [0, 0], sizes = [2, 128], strides = [1, 1]} : vector<2x512xf32> to vector<2x128xf32>
    %49 = arith.negf %48 : vector<2x128xf32>
    %50 = math.exp %49 : vector<2x128xf32>
    %cst_22 = arith.constant 1.000000e+00 : f32
    %51 = vector.broadcast %cst_22 : f32 to vector<2x128xf32>
    %52 = arith.addf %51, %50 : vector<2x128xf32>
    %53 = arith.divf %51, %52 : vector<2x128xf32>
    %54 = vector.extract_strided_slice %47 {offsets = [0, 128], sizes = [2, 128], strides = [1, 1]} : vector<2x512xf32> to vector<2x128xf32>
    %55 = arith.negf %54 : vector<2x128xf32>
    %56 = math.exp %55 : vector<2x128xf32>
    %cst_23 = arith.constant 1.000000e+00 : f32
    %57 = vector.broadcast %cst_23 : f32 to vector<2x128xf32>
    %58 = arith.addf %57, %56 : vector<2x128xf32>
    %59 = arith.divf %57, %58 : vector<2x128xf32>
    %60 = vector.extract_strided_slice %47 {offsets = [0, 256], sizes = [2, 128], strides = [1, 1]} : vector<2x512xf32> to vector<2x128xf32>
    %61 = math.tanh %60 : vector<2x128xf32>
    %62 = vector.extract_strided_slice %47 {offsets = [0, 384], sizes = [2, 128], strides = [1, 1]} : vector<2x512xf32> to vector<2x128xf32>
    %63 = arith.negf %62 : vector<2x128xf32>
    %64 = math.exp %63 : vector<2x128xf32>
    %cst_24 = arith.constant 1.000000e+00 : f32
    %65 = vector.broadcast %cst_24 : f32 to vector<2x128xf32>
    %66 = arith.addf %65, %64 : vector<2x128xf32>
    %67 = arith.divf %65, %66 : vector<2x128xf32>
    %68 = arith.mulf %59, %41 : vector<2x128xf32>
    %69 = arith.mulf %53, %61 : vector<2x128xf32>
    %70 = arith.addf %68, %69 : vector<2x128xf32>
    %71 = math.tanh %70 : vector<2x128xf32>
    %72 = arith.mulf %67, %71 : vector<2x128xf32>
    %c2 = arith.constant 2 : index
    %c0_25 = arith.constant 0 : index
    %73 = vector.load %arg13[%c2, %c0_25] : memref<16x128xf32, #tpu.memory_space<vmem>>, vector<2x128xf32>
    tpu.vector_store %arg13[%c2, %c0_25], %72 {strides = array<i32>} : memref<16x128xf32, #tpu.memory_space<vmem>>, vector<2x128xf32>,
    %74 = vector.extract_strided_slice %12 {offsets = [4, 0], sizes = [2, 512], strides = [1, 1]} : vector<16x512xf32> to vector<2x512xf32>
    %cst_26 = arith.constant dense<0.000000e+00> : vector<2x512xf32>
    %75 = tpu.matmul %72, %13, %cst_26 {dimension_numbers = #tpu.dot_dimension_numbers<[1], [0], [0], [1], [0, 0, 1, 1], [], []>} : vector<2x128xf32>, vector<128x512xf32>, vector<2x512xf32> -> vector<2x512xf32>
    %76 = arith.addf %74, %75 : vector<2x512xf32>
    %77 = vector.extract_strided_slice %76 {offsets = [0, 0], sizes = [2, 128], strides = [1, 1]} : vector<2x512xf32> to vector<2x128xf32>
    %78 = arith.negf %77 : vector<2x128xf32>
    %79 = math.exp %78 : vector<2x128xf32>
    %cst_27 = arith.constant 1.000000e+00 : f32
    %80 = vector.broadcast %cst_27 : f32 to vector<2x128xf32>
    %81 = arith.addf %80, %79 : vector<2x128xf32>
    %82 = arith.divf %80, %81 : vector<2x128xf32>
    %83 = vector.extract_strided_slice %76 {offsets = [0, 128], sizes = [2, 128], strides = [1, 1]} : vector<2x512xf32> to vector<2x128xf32>
    %84 = arith.negf %83 : vector<2x128xf32>
    %85 = math.exp %84 : vector<2x128xf32>
    %cst_28 = arith.constant 1.000000e+00 : f32
    %86 = vector.broadcast %cst_28 : f32 to vector<2x128xf32>
    %87 = arith.addf %86, %85 : vector<2x128xf32>
    %88 = arith.divf %86, %87 : vector<2x128xf32>
    %89 = vector.extract_strided_slice %76 {offsets = [0, 256], sizes = [2, 128], strides = [1, 1]} : vector<2x512xf32> to vector<2x128xf32>
    %90 = math.tanh %89 : vector<2x128xf32>
    %91 = vector.extract_strided_slice %76 {offsets = [0, 384], sizes = [2, 128], strides = [1, 1]} : vector<2x512xf32> to vector<2x128xf32>
    %92 = arith.negf %91 : vector<2x128xf32>
    %93 = math.exp %92 : vector<2x128xf32>
    %cst_29 = arith.constant 1.000000e+00 : f32
    %94 = vector.broadcast %cst_29 : f32 to vector<2x128xf32>
    %95 = arith.addf %94, %93 : vector<2x128xf32>
    %96 = arith.divf %94, %95 : vector<2x128xf32>
    %97 = arith.mulf %88, %70 : vector<2x128xf32>
    %98 = arith.mulf %82, %90 : vector<2x128xf32>
    %99 = arith.addf %97, %98 : vector<2x128xf32>
    %100 = math.tanh %99 : vector<2x128xf32>
    %101 = arith.mulf %96, %100 : vector<2x128xf32>
    %c4 = arith.constant 4 : index
    %c0_30 = arith.constant 0 : index
    %102 = vector.load %arg13[%c4, %c0_30] : memref<16x128xf32, #tpu.memory_space<vmem>>, vector<2x128xf32>
    tpu.vector_store %arg13[%c4, %c0_30], %101 {strides = array<i32>} : memref<16x128xf32, #tpu.memory_space<vmem>>, vector<2x128xf32>,
    %103 = vector.extract_strided_slice %12 {offsets = [6, 0], sizes = [2, 512], strides = [1, 1]} : vector<16x512xf32> to vector<2x512xf32>
    %cst_31 = arith.constant dense<0.000000e+00> : vector<2x512xf32>
    %104 = tpu.matmul %101, %13, %cst_31 {dimension_numbers = #tpu.dot_dimension_numbers<[1], [0], [0], [1], [0, 0, 1, 1], [], []>} : vector<2x128xf32>, vector<128x512xf32>, vector<2x512xf32> -> vector<2x512xf32>
    %105 = arith.addf %103, %104 : vector<2x512xf32>
    %106 = vector.extract_strided_slice %105 {offsets = [0, 0], sizes = [2, 128], strides = [1, 1]} : vector<2x512xf32> to vector<2x128xf32>
    %107 = arith.negf %106 : vector<2x128xf32>
    %108 = math.exp %107 : vector<2x128xf32>
    %cst_32 = arith.constant 1.000000e+00 : f32
    %109 = vector.broadcast %cst_32 : f32 to vector<2x128xf32>
    %110 = arith.addf %109, %108 : vector<2x128xf32>
    %111 = arith.divf %109, %110 : vector<2x128xf32>
    %112 = vector.extract_strided_slice %105 {offsets = [0, 128], sizes = [2, 128], strides = [1, 1]} : vector<2x512xf32> to vector<2x128xf32>
    %113 = arith.negf %112 : vector<2x128xf32>
    %114 = math.exp %113 : vector<2x128xf32>
    %cst_33 = arith.constant 1.000000e+00 : f32
    %115 = vector.broadcast %cst_33 : f32 to vector<2x128xf32>
    %116 = arith.addf %115, %114 : vector<2x128xf32>
    %117 = arith.divf %115, %116 : vector<2x128xf32>
    %118 = vector.extract_strided_slice %105 {offsets = [0, 256], sizes = [2, 128], strides = [1, 1]} : vector<2x512xf32> to vector<2x128xf32>
    %119 = math.tanh %118 : vector<2x128xf32>
    %120 = vector.extract_strided_slice %105 {offsets = [0, 384], sizes = [2, 128], strides = [1, 1]} : vector<2x512xf32> to vector<2x128xf32>
    %121 = arith.negf %120 : vector<2x128xf32>
    %122 = math.exp %121 : vector<2x128xf32>
    %cst_34 = arith.constant 1.000000e+00 : f32
    %123 = vector.broadcast %cst_34 : f32 to vector<2x128xf32>
    %124 = arith.addf %123, %122 : vector<2x128xf32>
    %125 = arith.divf %123, %124 : vector<2x128xf32>
    %126 = arith.mulf %117, %99 : vector<2x128xf32>
    %127 = arith.mulf %111, %119 : vector<2x128xf32>
    %128 = arith.addf %126, %127 : vector<2x128xf32>
    %129 = math.tanh %128 : vector<2x128xf32>
    %130 = arith.mulf %125, %129 : vector<2x128xf32>
    %c6 = arith.constant 6 : index
    %c0_35 = arith.constant 0 : index
    %131 = vector.load %arg13[%c6, %c0_35] : memref<16x128xf32, #tpu.memory_space<vmem>>, vector<2x128xf32>
    tpu.vector_store %arg13[%c6, %c0_35], %130 {strides = array<i32>} : memref<16x128xf32, #tpu.memory_space<vmem>>, vector<2x128xf32>,
    %132 = vector.extract_strided_slice %12 {offsets = [8, 0], sizes = [2, 512], strides = [1, 1]} : vector<16x512xf32> to vector<2x512xf32>
    %cst_36 = arith.constant dense<0.000000e+00> : vector<2x512xf32>
    %133 = tpu.matmul %130, %13, %cst_36 {dimension_numbers = #tpu.dot_dimension_numbers<[1], [0], [0], [1], [0, 0, 1, 1], [], []>} : vector<2x128xf32>, vector<128x512xf32>, vector<2x512xf32> -> vector<2x512xf32>
    %134 = arith.addf %132, %133 : vector<2x512xf32>
    %135 = vector.extract_strided_slice %134 {offsets = [0, 0], sizes = [2, 128], strides = [1, 1]} : vector<2x512xf32> to vector<2x128xf32>
    %136 = arith.negf %135 : vector<2x128xf32>
    %137 = math.exp %136 : vector<2x128xf32>
    %cst_37 = arith.constant 1.000000e+00 : f32
    %138 = vector.broadcast %cst_37 : f32 to vector<2x128xf32>
    %139 = arith.addf %138, %137 : vector<2x128xf32>
    %140 = arith.divf %138, %139 : vector<2x128xf32>
    %141 = vector.extract_strided_slice %134 {offsets = [0, 128], sizes = [2, 128], strides = [1, 1]} : vector<2x512xf32> to vector<2x128xf32>
    %142 = arith.negf %141 : vector<2x128xf32>
    %143 = math.exp %142 : vector<2x128xf32>
    %cst_38 = arith.constant 1.000000e+00 : f32
    %144 = vector.broadcast %cst_38 : f32 to vector<2x128xf32>
    %145 = arith.addf %144, %143 : vector<2x128xf32>
    %146 = arith.divf %144, %145 : vector<2x128xf32>
    %147 = vector.extract_strided_slice %134 {offsets = [0, 256], sizes = [2, 128], strides = [1, 1]} : vector<2x512xf32> to vector<2x128xf32>
    %148 = math.tanh %147 : vector<2x128xf32>
    %149 = vector.extract_strided_slice %134 {offsets = [0, 384], sizes = [2, 128], strides = [1, 1]} : vector<2x512xf32> to vector<2x128xf32>
    %150 = arith.negf %149 : vector<2x128xf32>
    %151 = math.exp %150 : vector<2x128xf32>
    %cst_39 = arith.constant 1.000000e+00 : f32
    %152 = vector.broadcast %cst_39 : f32 to vector<2x128xf32>
    %153 = arith.addf %152, %151 : vector<2x128xf32>
    %154 = arith.divf %152, %153 : vector<2x128xf32>
    %155 = arith.mulf %146, %128 : vector<2x128xf32>
    %156 = arith.mulf %140, %148 : vector<2x128xf32>
    %157 = arith.addf %155, %156 : vector<2x128xf32>
    %158 = math.tanh %157 : vector<2x128xf32>
    %159 = arith.mulf %154, %158 : vector<2x128xf32>
    %c8 = arith.constant 8 : index
    %c0_40 = arith.constant 0 : index
    %160 = vector.load %arg13[%c8, %c0_40] : memref<16x128xf32, #tpu.memory_space<vmem>>, vector<2x128xf32>
    tpu.vector_store %arg13[%c8, %c0_40], %159 {strides = array<i32>} : memref<16x128xf32, #tpu.memory_space<vmem>>, vector<2x128xf32>,
    %161 = vector.extract_strided_slice %12 {offsets = [10, 0], sizes = [2, 512], strides = [1, 1]} : vector<16x512xf32> to vector<2x512xf32>
    %cst_41 = arith.constant dense<0.000000e+00> : vector<2x512xf32>
    %162 = tpu.matmul %159, %13, %cst_41 {dimension_numbers = #tpu.dot_dimension_numbers<[1], [0], [0], [1], [0, 0, 1, 1], [], []>} : vector<2x128xf32>, vector<128x512xf32>, vector<2x512xf32> -> vector<2x512xf32>
    %163 = arith.addf %161, %162 : vector<2x512xf32>
    %164 = vector.extract_strided_slice %163 {offsets = [0, 0], sizes = [2, 128], strides = [1, 1]} : vector<2x512xf32> to vector<2x128xf32>
    %165 = arith.negf %164 : vector<2x128xf32>
    %166 = math.exp %165 : vector<2x128xf32>
    %cst_42 = arith.constant 1.000000e+00 : f32
    %167 = vector.broadcast %cst_42 : f32 to vector<2x128xf32>
    %168 = arith.addf %167, %166 : vector<2x128xf32>
    %169 = arith.divf %167, %168 : vector<2x128xf32>
    %170 = vector.extract_strided_slice %163 {offsets = [0, 128], sizes = [2, 128], strides = [1, 1]} : vector<2x512xf32> to vector<2x128xf32>
    %171 = arith.negf %170 : vector<2x128xf32>
    %172 = math.exp %171 : vector<2x128xf32>
    %cst_43 = arith.constant 1.000000e+00 : f32
    %173 = vector.broadcast %cst_43 : f32 to vector<2x128xf32>
    %174 = arith.addf %173, %172 : vector<2x128xf32>
    %175 = arith.divf %173, %174 : vector<2x128xf32>
    %176 = vector.extract_strided_slice %163 {offsets = [0, 256], sizes = [2, 128], strides = [1, 1]} : vector<2x512xf32> to vector<2x128xf32>
    %177 = math.tanh %176 : vector<2x128xf32>
    %178 = vector.extract_strided_slice %163 {offsets = [0, 384], sizes = [2, 128], strides = [1, 1]} : vector<2x512xf32> to vector<2x128xf32>
    %179 = arith.negf %178 : vector<2x128xf32>
    %180 = math.exp %179 : vector<2x128xf32>
    %cst_44 = arith.constant 1.000000e+00 : f32
    %181 = vector.broadcast %cst_44 : f32 to vector<2x128xf32>
    %182 = arith.addf %181, %180 : vector<2x128xf32>
    %183 = arith.divf %181, %182 : vector<2x128xf32>
    %184 = arith.mulf %175, %157 : vector<2x128xf32>
    %185 = arith.mulf %169, %177 : vector<2x128xf32>
    %186 = arith.addf %184, %185 : vector<2x128xf32>
    %187 = math.tanh %186 : vector<2x128xf32>
    %188 = arith.mulf %183, %187 : vector<2x128xf32>
    %c10 = arith.constant 10 : index
    %c0_45 = arith.constant 0 : index
    %189 = vector.load %arg13[%c10, %c0_45] : memref<16x128xf32, #tpu.memory_space<vmem>>, vector<2x128xf32>
    tpu.vector_store %arg13[%c10, %c0_45], %188 {strides = array<i32>} : memref<16x128xf32, #tpu.memory_space<vmem>>, vector<2x128xf32>,
    %190 = vector.extract_strided_slice %12 {offsets = [12, 0], sizes = [2, 512], strides = [1, 1]} : vector<16x512xf32> to vector<2x512xf32>
    %cst_46 = arith.constant dense<0.000000e+00> : vector<2x512xf32>
    %191 = tpu.matmul %188, %13, %cst_46 {dimension_numbers = #tpu.dot_dimension_numbers<[1], [0], [0], [1], [0, 0, 1, 1], [], []>} : vector<2x128xf32>, vector<128x512xf32>, vector<2x512xf32> -> vector<2x512xf32>
    %192 = arith.addf %190, %191 : vector<2x512xf32>
    %193 = vector.extract_strided_slice %192 {offsets = [0, 0], sizes = [2, 128], strides = [1, 1]} : vector<2x512xf32> to vector<2x128xf32>
    %194 = arith.negf %193 : vector<2x128xf32>
    %195 = math.exp %194 : vector<2x128xf32>
    %cst_47 = arith.constant 1.000000e+00 : f32
    %196 = vector.broadcast %cst_47 : f32 to vector<2x128xf32>
    %197 = arith.addf %196, %195 : vector<2x128xf32>
    %198 = arith.divf %196, %197 : vector<2x128xf32>
    %199 = vector.extract_strided_slice %192 {offsets = [0, 128], sizes = [2, 128], strides = [1, 1]} : vector<2x512xf32> to vector<2x128xf32>
    %200 = arith.negf %199 : vector<2x128xf32>
    %201 = math.exp %200 : vector<2x128xf32>
    %cst_48 = arith.constant 1.000000e+00 : f32
    %202 = vector.broadcast %cst_48 : f32 to vector<2x128xf32>
    %203 = arith.addf %202, %201 : vector<2x128xf32>
    %204 = arith.divf %202, %203 : vector<2x128xf32>
    %205 = vector.extract_strided_slice %192 {offsets = [0, 256], sizes = [2, 128], strides = [1, 1]} : vector<2x512xf32> to vector<2x128xf32>
    %206 = math.tanh %205 : vector<2x128xf32>
    %207 = vector.extract_strided_slice %192 {offsets = [0, 384], sizes = [2, 128], strides = [1, 1]} : vector<2x512xf32> to vector<2x128xf32>
    %208 = arith.negf %207 : vector<2x128xf32>
    %209 = math.exp %208 : vector<2x128xf32>
    %cst_49 = arith.constant 1.000000e+00 : f32
    %210 = vector.broadcast %cst_49 : f32 to vector<2x128xf32>
    %211 = arith.addf %210, %209 : vector<2x128xf32>
    %212 = arith.divf %210, %211 : vector<2x128xf32>
    %213 = arith.mulf %204, %186 : vector<2x128xf32>
    %214 = arith.mulf %198, %206 : vector<2x128xf32>
    %215 = arith.addf %213, %214 : vector<2x128xf32>
    %216 = math.tanh %215 : vector<2x128xf32>
    %217 = arith.mulf %212, %216 : vector<2x128xf32>
    %c12 = arith.constant 12 : index
    %c0_50 = arith.constant 0 : index
    %218 = vector.load %arg13[%c12, %c0_50] : memref<16x128xf32, #tpu.memory_space<vmem>>, vector<2x128xf32>
    tpu.vector_store %arg13[%c12, %c0_50], %217 {strides = array<i32>} : memref<16x128xf32, #tpu.memory_space<vmem>>, vector<2x128xf32>,
    %219 = vector.extract_strided_slice %12 {offsets = [14, 0], sizes = [2, 512], strides = [1, 1]} : vector<16x512xf32> to vector<2x512xf32>
    %cst_51 = arith.constant dense<0.000000e+00> : vector<2x512xf32>
    %220 = tpu.matmul %217, %13, %cst_51 {dimension_numbers = #tpu.dot_dimension_numbers<[1], [0], [0], [1], [0, 0, 1, 1], [], []>} : vector<2x128xf32>, vector<128x512xf32>, vector<2x512xf32> -> vector<2x512xf32>
    %221 = arith.addf %219, %220 : vector<2x512xf32>
    %222 = vector.extract_strided_slice %221 {offsets = [0, 0], sizes = [2, 128], strides = [1, 1]} : vector<2x512xf32> to vector<2x128xf32>
    %223 = arith.negf %222 : vector<2x128xf32>
    %224 = math.exp %223 : vector<2x128xf32>
    %cst_52 = arith.constant 1.000000e+00 : f32
    %225 = vector.broadcast %cst_52 : f32 to vector<2x128xf32>
    %226 = arith.addf %225, %224 : vector<2x128xf32>
    %227 = arith.divf %225, %226 : vector<2x128xf32>
    %228 = vector.extract_strided_slice %221 {offsets = [0, 128], sizes = [2, 128], strides = [1, 1]} : vector<2x512xf32> to vector<2x128xf32>
    %229 = arith.negf %228 : vector<2x128xf32>
    %230 = math.exp %229 : vector<2x128xf32>
    %cst_53 = arith.constant 1.000000e+00 : f32
    %231 = vector.broadcast %cst_53 : f32 to vector<2x128xf32>
    %232 = arith.addf %231, %230 : vector<2x128xf32>
    %233 = arith.divf %231, %232 : vector<2x128xf32>
    %234 = vector.extract_strided_slice %221 {offsets = [0, 256], sizes = [2, 128], strides = [1, 1]} : vector<2x512xf32> to vector<2x128xf32>
    %235 = math.tanh %234 : vector<2x128xf32>
    %236 = vector.extract_strided_slice %221 {offsets = [0, 384], sizes = [2, 128], strides = [1, 1]} : vector<2x512xf32> to vector<2x128xf32>
    %237 = arith.negf %236 : vector<2x128xf32>
    %238 = math.exp %237 : vector<2x128xf32>
    %cst_54 = arith.constant 1.000000e+00 : f32
    %239 = vector.broadcast %cst_54 : f32 to vector<2x128xf32>
    %240 = arith.addf %239, %238 : vector<2x128xf32>
    %241 = arith.divf %239, %240 : vector<2x128xf32>
    %242 = arith.mulf %233, %215 : vector<2x128xf32>
    %243 = arith.mulf %227, %235 : vector<2x128xf32>
    %244 = arith.addf %242, %243 : vector<2x128xf32>
    %245 = math.tanh %244 : vector<2x128xf32>
    %246 = arith.mulf %241, %245 : vector<2x128xf32>
    %c14 = arith.constant 14 : index
    %c0_55 = arith.constant 0 : index
    %247 = vector.load %arg13[%c14, %c0_55] : memref<16x128xf32, #tpu.memory_space<vmem>>, vector<2x128xf32>
    tpu.vector_store %arg13[%c14, %c0_55], %246 {strides = array<i32>} : memref<16x128xf32, #tpu.memory_space<vmem>>, vector<2x128xf32>,
    %c0_56 = arith.constant 0 : index
    %c0_57 = arith.constant 0 : index
    %248 = vector.load %arg13[%c0_56, %c0_57] : memref<16x128xf32, #tpu.memory_space<vmem>>, vector<16x128xf32>
    %c0_58 = arith.constant 0 : index
    %c0_59 = arith.constant 0 : index
    %249 = vector.load %arg6[%c0_58, %c0_59] : memref<128x64xf32, #tpu.memory_space<vmem>>, vector<128x64xf32>
    %cst_60 = arith.constant dense<0.000000e+00> : vector<16x64xf32>
    %250 = tpu.matmul %248, %249, %cst_60 {dimension_numbers = #tpu.dot_dimension_numbers<[1], [0], [0], [1], [0, 0, 1, 1], [], []>} : vector<16x128xf32>, vector<128x64xf32>, vector<16x64xf32> -> vector<16x64xf32>
    %c0_61 = arith.constant 0 : index
    %c0_62 = arith.constant 0 : index
    %251 = vector.load %arg7[%c0_61, %c0_62] : memref<1x64xf32, #tpu.memory_space<vmem>>, vector<1x64xf32>
    %252 = vector.broadcast %251 : vector<1x64xf32> to vector<16x64xf32>
    %253 = arith.addf %250, %252 : vector<16x64xf32>
    %cst_63 = arith.constant 0.000000e+00 : f32
    %254 = vector.broadcast %cst_63 : f32 to vector<16x64xf32>
    %255 = arith.maximumf %253, %254 : vector<16x64xf32>
    %c0_64 = arith.constant 0 : index
    %c0_65 = arith.constant 0 : index
    %256 = vector.load %arg8[%c0_64, %c0_65] : memref<64x64xf32, #tpu.memory_space<vmem>>, vector<64x64xf32>
    %cst_66 = arith.constant dense<0.000000e+00> : vector<16x64xf32>
    %257 = tpu.matmul %255, %256, %cst_66 {dimension_numbers = #tpu.dot_dimension_numbers<[1], [0], [0], [1], [0, 0, 1, 1], [], []>} : vector<16x64xf32>, vector<64x64xf32>, vector<16x64xf32> -> vector<16x64xf32>
    %c0_67 = arith.constant 0 : index
    %c0_68 = arith.constant 0 : index
    %258 = vector.load %arg9[%c0_67, %c0_68] : memref<1x64xf32, #tpu.memory_space<vmem>>, vector<1x64xf32>
    %259 = vector.broadcast %258 : vector<1x64xf32> to vector<16x64xf32>
    %260 = arith.addf %257, %259 : vector<16x64xf32>
    %cst_69 = arith.constant 0.000000e+00 : f32
    %261 = vector.broadcast %cst_69 : f32 to vector<16x64xf32>
    %262 = arith.maximumf %260, %261 : vector<16x64xf32>
    %c0_70 = arith.constant 0 : index
    %c0_71 = arith.constant 0 : index
    %263 = vector.load %arg10[%c0_70, %c0_71] : memref<64x128xf32, #tpu.memory_space<vmem>>, vector<64x128xf32>
    %cst_72 = arith.constant dense<0.000000e+00> : vector<16x128xf32>
    %264 = tpu.matmul %262, %263, %cst_72 {dimension_numbers = #tpu.dot_dimension_numbers<[1], [0], [0], [1], [0, 0, 1, 1], [], []>} : vector<16x64xf32>, vector<64x128xf32>, vector<16x128xf32> -> vector<16x128xf32>
    %c0_73 = arith.constant 0 : index
    %c0_74 = arith.constant 0 : index
    %265 = vector.load %arg11[%c0_73, %c0_74] : memref<1x128xf32, #tpu.memory_space<vmem>>, vector<1x128xf32>
    %266 = vector.broadcast %265 : vector<1x128xf32> to vector<16x128xf32>
    %267 = arith.addf %264, %266 : vector<16x128xf32>
    %cst_75 = arith.constant 0.000000e+00 : f32
    %268 = vector.broadcast %cst_75 : f32 to vector<16x128xf32>
    %269 = arith.maximumf %267, %268 : vector<16x128xf32>
    %c0_76 = arith.constant 0 : index
    %c0_77 = arith.constant 0 : index
    %270 = vector.load %arg12[%c0_76, %c0_77] : memref<16x128xf32, #tpu.memory_space<vmem>>, vector<16x128xf32>
    tpu.vector_store %arg12[%c0_76, %c0_77], %269 {strides = array<i32>} : memref<16x128xf32, #tpu.memory_space<vmem>>, vector<16x128xf32>,
    return
  }
}

</mosaic_0001>

<llo_original>
// kernel: player_box_score_lstm_forward.1
$region0: #{player_box_score_lstm_forward.1}
  #allocation0 [shape = 'u32[]', space=smem, size = 0x4, offset = 0x4, fixed_abs, tag = 'smem constant byte address 0x4 - core index']
  #allocation1 [shape = 'u32[72,128]{1,0:T(1,128)}', space=vmem, size = 0x9000, scoped, tag = 'internal scratch']
  #allocation2 [shape = 'f32[16,128]{1,0:T(8,128)}', space=vmem, size = 0x2000, scoped, tag = 'scratch operand']
  %s0 = inlined_call_operand.vmem [shape: f32[16,64], index: 0, kind: input, shape index: {}]
  %s1 = inlined_call_operand.vmem [shape: f32[64,64], index: 1, kind: input, shape index: {}]
  %s2 = inlined_call_operand.vmem [shape: f32[1,64], index: 2, kind: input, shape index: {}]
  %s3 = inlined_call_operand.vmem [shape: f32[64,512], index: 3, kind: input, shape index: {}]
  %s4 = inlined_call_operand.vmem [shape: f32[1,512], index: 4, kind: input, shape index: {}]
  %s5 = inlined_call_operand.hbm [shape: f32[128,512], index: 5, kind: input, shape index: {}]
  %s6 = inlined_call_operand.vmem [shape: f32[128,64], index: 6, kind: input, shape index: {}]
  %s7 = inlined_call_operand.vmem [shape: f32[1,64], index: 7, kind: input, shape index: {}]
  %s8 = inlined_call_operand.vmem [shape: f32[64,64], index: 8, kind: input, shape index: {}]
  %s9 = inlined_call_operand.vmem [shape: f32[1,64], index: 9, kind: input, shape index: {}]
  %s10 = inlined_call_operand.vmem [shape: f32[64,128], index: 10, kind: input, shape index: {}]
  %s11 = inlined_call_operand.vmem [shape: f32[1,128], index: 11, kind: input, shape index: {}]
  %s12 = inlined_call_operand.vmem [shape: f32[16,128], index: 12, kind: output, shape index: {}]
  %s13 = sld [smem:[#allocation0]]
  $region62: #{player_box_score_lstm_forward.1} parent=0
    _
  %s15 = ssub.s32 1, %s13
  %s16 = scalar_select 0, %s15, %s13
  $region1: #{player_box_score_lstm_forward.1} parent=0
    #allocation3 [shape = 'u8[262144]{0}', space=vmem, size = 0x40000, scoped, tag = 'input window, operand 5, single buffered']
    #allocation4 [shape = 's32[1]{0}', space=sflag, size = 0x4, scoped, tag = 'scoped memory for player_box_score_lstm_forward.1']
    %17 = vsyncpa [#allocation4], 0
    // Predicated region
    $region2: #{player_box_score_lstm_forward.1} parent=1 // pred_check
      _
    $region3: #{player_box_score_lstm_forward.1} parent=1 // pred_check_branch
      %19 = sbr.rel (0) target = $region5
    $region4: #{player_box_score_lstm_forward.1} parent=1 // pred_region
      _
    $region5: #{player_box_score_lstm_forward.1} parent=1 // pred_fallthru
      _
    // Predicated region
    $region6: #{player_box_score_lstm_forward.1} parent=1 // pred_check
      _
    $region7: #{player_box_score_lstm_forward.1} parent=1 // pred_check_branch
      %21 = sbr.rel (0) target = $region9
    $region8: #{player_box_score_lstm_forward.1} parent=1 // pred_region
      _
    $region9: #{player_box_score_lstm_forward.1} parent=1 // pred_fallthru
      _
    // Predicated region
    $region10: #{player_box_score_lstm_forward.1} parent=1 // pred_check
      _
    $region11: #{player_box_score_lstm_forward.1} parent=1 // pred_check_branch
      %23 = sbr.rel (0) target = $region13
    $region12: #{player_box_score_lstm_forward.1} parent=1 // pred_region
      _
    $region13: #{player_box_score_lstm_forward.1} parent=1 // pred_fallthru
      _
    // Predicated region
    $region14: #{player_box_score_lstm_forward.1} parent=1 // pred_check
      _
    $region15: #{player_box_score_lstm_forward.1} parent=1 // pred_check_branch
      %25 = sbr.rel (0) target = $region17
    $region16: #{player_box_score_lstm_forward.1} parent=1 // pred_region
      _
    $region17: #{player_box_score_lstm_forward.1} parent=1 // pred_fallthru
      _
    // Predicated region
    $region18: #{player_box_score_lstm_forward.1} parent=1 // pred_check
      _
    $region19: #{player_box_score_lstm_forward.1} parent=1 // pred_check_branch
      %27 = sbr.rel (0) target = $region21
    $region20: #{player_box_score_lstm_forward.1} parent=1 // pred_region
      _
    $region21: #{player_box_score_lstm_forward.1} parent=1 // pred_fallthru
      _
    // Predicated region
    $region22: #{player_box_score_lstm_forward.1} parent=1 // pred_check
      _
    $region23: #{player_box_score_lstm_forward.1} parent=1 // pred_check_branch
      %29 = sbr.rel (0) target = $region25
    $region24: #{player_box_score_lstm_forward.1} parent=1 // pred_region
      %31 = vsyncadd [#allocation4], 0
      %s32 = sshll.u32 %s5, 4
      %s33 = int_to_ptr.hbm [resolvable:$true] %s32
      %s34 = sshll.u32 [#allocation3], 4
      %s35 = int_to_ptr.vmem [resolvable:$true] %s34
      %40 = dma.hbm_to_vmem [thread:$0]  %s33, 8192, %s35, [#allocation4], 512, 512, 32
    $region25: #{player_box_score_lstm_forward.1} parent=1 // pred_fallthru
      _
    // Predicated region
    $region26: #{player_box_score_lstm_forward.1} parent=1 // pred_check
      _
    $region27: #{player_box_score_lstm_forward.1} parent=1 // pred_check_branch
      %42 = sbr.rel (0) target = $region29
    $region28: #{player_box_score_lstm_forward.1} parent=1 // pred_region
      _
    $region29: #{player_box_score_lstm_forward.1} parent=1 // pred_fallthru
      _
    // Predicated region
    $region30: #{player_box_score_lstm_forward.1} parent=1 // pred_check
      _
    $region31: #{player_box_score_lstm_forward.1} parent=1 // pred_check_branch
      %44 = sbr.rel (0) target = $region33
    $region32: #{player_box_score_lstm_forward.1} parent=1 // pred_region
      _
    $region33: #{player_box_score_lstm_forward.1} parent=1 // pred_fallthru
      _
    // Predicated region
    $region34: #{player_box_score_lstm_forward.1} parent=1 // pred_check
      _
    $region35: #{player_box_score_lstm_forward.1} parent=1 // pred_check_branch
      %46 = sbr.rel (0) target = $region37
    $region36: #{player_box_score_lstm_forward.1} parent=1 // pred_region
      _
    $region37: #{player_box_score_lstm_forward.1} parent=1 // pred_fallthru
      _
    // Predicated region
    $region38: #{player_box_score_lstm_forward.1} parent=1 // pred_check
      _
    $region39: #{player_box_score_lstm_forward.1} parent=1 // pred_check_branch
      %48 = sbr.rel (0) target = $region41
    $region40: #{player_box_score_lstm_forward.1} parent=1 // pred_region
      _
    $region41: #{player_box_score_lstm_forward.1} parent=1 // pred_fallthru
      _
    // Predicated region
    $region42: #{player_box_score_lstm_forward.1} parent=1 // pred_check
      _
    $region43: #{player_box_score_lstm_forward.1} parent=1 // pred_check_branch
      %50 = sbr.rel (0) target = $region45
    $region44: #{player_box_score_lstm_forward.1} parent=1 // pred_region
      _
    $region45: #{player_box_score_lstm_forward.1} parent=1 // pred_fallthru
      _
    // Predicated region
    $region46: #{player_box_score_lstm_forward.1} parent=1 // pred_check
      _
    $region47: #{player_box_score_lstm_forward.1} parent=1 // pred_check_branch
      %52 = sbr.rel (0) target = $region49
    $region48: #{player_box_score_lstm_forward.1} parent=1 // pred_region
      _
    $region49: #{player_box_score_lstm_forward.1} parent=1 // pred_fallthru
      _
    // Predicated region
    $region50: #{player_box_score_lstm_forward.1} parent=1 // pred_check
      _
    $region51: #{player_box_score_lstm_forward.1} parent=1 // pred_check_branch
      %54 = sbr.rel (0) target = $region53
    $region52: #{player_box_score_lstm_forward.1} parent=1 // pred_region
      %56 = dma.done [#allocation4], 8192
    $region53: #{player_box_score_lstm_forward.1} parent=1 // pred_fallthru
      _
    %v57 = vld [vmem:[%s0] sm:$0xff]
    %v58 = vld [vmem:[%s0 + $0x8] sm:$0xff]
    %v59 = vld [vmem:[%s1] sm:$0xff]
    %v60 = vld [vmem:[%s1 + $0x8] sm:$0xff]
    %v61 = vld [vmem:[%s1 + $0x10] sm:$0xff]
    %v62 = vld [vmem:[%s1 + $0x18] sm:$0xff]
    %v63 = vld [vmem:[%s1 + $0x20] sm:$0xff]
    %v64 = vld [vmem:[%s1 + $0x28] sm:$0xff]
    %v65 = vld [vmem:[%s1 + $0x30] sm:$0xff]
    %v66 = vld [vmem:[%s1 + $0x38] sm:$0xff]
    %v67 = vld [vmem:[%s2] sm:$0x1]
    %v69 = vperm.slane %v67, 0
    %vm71 = vcmask 523264
    %v73 = vsel %vm71, %v57, 0
    %v76 = vsel %vm71, %v58, 0
    %78 = vmatpush.msra.mxu0 0.0
    %79 = vmatpush.msra.mxu0 0.0
    %80 = vmatpush.msra.mxu0 0.0
    %81 = vmatpush.msra.mxu0 0.0
    %82 = vmatpush.msra.mxu0 0.0
    %83 = vmatpush.msra.mxu0 0.0
    %84 = vmatpush.msra.mxu0 0.0
    %85 = vmatpush.msra.mxu0 0.0
    %86 = vmatpush.msra.mxu0 %v66
    %87 = vmatpush.msra.mxu0 %v65
    %88 = vmatpush.msra.mxu0 %v64
    %89 = vmatpush.msra.mxu0 %v63
    %90 = vmatpush.msra.mxu0 %v62
    %91 = vmatpush.msra.mxu0 %v61
    %92 = vmatpush.msra.mxu0 %v60
    %93 = vmatpush.msra.mxu0 %v59
    %94 = vmatmul.f32.gmra.mxu0 %v73
    %v95 = vpop.f32.mrf.mxu0
    %v96 = vadd.f32 %v69, %v95
    %97 = vmatmul.f32.gmra.mxu0 %v76
    %v98 = vpop.f32.mrf.mxu0
    %v99 = vadd.f32 %v69, %v98
    %100 = vdwg.mxu0
    %v101 = vmax.f32 %v96, 0.0
    %v102 = vmax.f32 %v99, 0.0
    %v103 = vld [vmem:[%s3] sm:$0xff]
    %v104 = vld [vmem:[%s3 + $0x8] sm:$0xff]
    %v105 = vld [vmem:[%s3 + $0x10] sm:$0xff]
    %v106 = vld [vmem:[%s3 + $0x18] sm:$0xff]
    %v107 = vld [vmem:[%s3 + $0x20] sm:$0xff]
    %v108 = vld [vmem:[%s3 + $0x28] sm:$0xff]
    %v109 = vld [vmem:[%s3 + $0x30] sm:$0xff]
    %v110 = vld [vmem:[%s3 + $0x38] sm:$0xff]
    %v111 = vld [vmem:[%s3 + $0x40] sm:$0xff]
    %v112 = vld [vmem:[%s3 + $0x48] sm:$0xff]
    %v113 = vld [vmem:[%s3 + $0x50] sm:$0xff]
    %v114 = vld [vmem:[%s3 + $0x58] sm:$0xff]
    %v115 = vld [vmem:[%s3 + $0x60] sm:$0xff]
    %v116 = vld [vmem:[%s3 + $0x68] sm:$0xff]
    %v117 = vld [vmem:[%s3 + $0x70] sm:$0xff]
    %v118 = vld [vmem:[%s3 + $0x78] sm:$0xff]
    %v119 = vld [vmem:[%s3 + $0x80] sm:$0xff]
    %v120 = vld [vmem:[%s3 + $0x88] sm:$0xff]
    %v121 = vld [vmem:[%s3 + $0x90] sm:$0xff]
    %v122 = vld [vmem:[%s3 + $0x98] sm:$0xff]
    %v123 = vld [vmem:[%s3 + $0xa0] sm:$0xff]
    %v124 = vld [vmem:[%s3 + $0xa8] sm:$0xff]
    %v125 = vld [vmem:[%s3 + $0xb0] sm:$0xff]
    %v126 = vld [vmem:[%s3 + $0xb8] sm:$0xff]
    %v127 = vld [vmem:[%s3 + $0xc0] sm:$0xff]
    %v128 = vld [vmem:[%s3 + $0xc8] sm:$0xff]
    %v129 = vld [vmem:[%s3 + $0xd0] sm:$0xff]
    %v130 = vld [vmem:[%s3 + $0xd8] sm:$0xff]
    %v131 = vld [vmem:[%s3 + $0xe0] sm:$0xff]
    %v132 = vld [vmem:[%s3 + $0xe8] sm:$0xff]
    %v133 = vld [vmem:[%s3 + $0xf0] sm:$0xff]
    %v134 = vld [vmem:[%s3 + $0xf8] sm:$0xff]
    %v135 = vld [vmem:[%s4] sm:$0xf]
    %v137 = vperm.slane %v135, 0
    %v138 = vperm.slane %v135, 1
    %v139 = vperm.slane %v135, 2
    %v140 = vperm.slane %v135, 3
    %v146 = vsel %vm71, %v101, 0
    %v149 = vsel %vm71, %v102, 0
    %151 = vmatpush.msra.mxu0 0.0
    %152 = vmatpush.msra.mxu0 0.0
    %153 = vmatpush.msra.mxu0 0.0
    %154 = vmatpush.msra.mxu0 0.0
    %155 = vmatpush.msra.mxu0 0.0
    %156 = vmatpush.msra.mxu0 0.0
    %157 = vmatpush.msra.mxu0 0.0
    %158 = vmatpush.msra.mxu0 0.0
    %159 = vmatpush.msra.mxu0 %v131
    %160 = vmatpush.msra.mxu0 %v127
    %161 = vmatpush.msra.mxu0 %v123
    %162 = vmatpush.msra.mxu0 %v119
    %163 = vmatpush.msra.mxu0 %v115
    %164 = vmatpush.msra.mxu0 %v111
    %165 = vmatpush.msra.mxu0 %v107
    %166 = vmatpush.msra.mxu0 %v103
    %167 = vmatmul.f32.gmra.mxu0 %v146
    %v168 = vpop.f32.mrf.mxu0
    %v169 = vadd.f32 %v137, %v168
    %170 = vmatmul.f32.gmra.mxu0 %v149
    %v171 = vpop.f32.mrf.mxu0
    %v172 = vadd.f32 %v137, %v171
    %173 = vdwg.mxu0
    %174 = vmatpush.msra.mxu0 0.0
    %175 = vmatpush.msra.mxu0 0.0
    %176 = vmatpush.msra.mxu0 0.0
    %177 = vmatpush.msra.mxu0 0.0
    %178 = vmatpush.msra.mxu0 0.0
    %179 = vmatpush.msra.mxu0 0.0
    %180 = vmatpush.msra.mxu0 0.0
    %181 = vmatpush.msra.mxu0 0.0
    %182 = vmatpush.msra.mxu0 %v132
    %183 = vmatpush.msra.mxu0 %v128
    %184 = vmatpush.msra.mxu0 %v124
    %185 = vmatpush.msra.mxu0 %v120
    %186 = vmatpush.msra.mxu0 %v116
    %187 = vmatpush.msra.mxu0 %v112
    %188 = vmatpush.msra.mxu0 %v108
    %189 = vmatpush.msra.mxu0 %v104
    %190 = vmatmul.f32.gmra.mxu0 %v146
    %v191 = vpop.f32.mrf.mxu0
    %v192 = vadd.f32 %v138, %v191
    %193 = vmatmul.f32.gmra.mxu0 %v149
    %v194 = vpop.f32.mrf.mxu0
    %v195 = vadd.f32 %v138, %v194
    %196 = vdwg.mxu0
    %197 = vmatpush.msra.mxu0 0.0
    %198 = vmatpush.msra.mxu0 0.0
    %199 = vmatpush.msra.mxu0 0.0
    %200 = vmatpush.msra.mxu0 0.0
    %201 = vmatpush.msra.mxu0 0.0
    %202 = vmatpush.msra.mxu0 0.0
    %203 = vmatpush.msra.mxu0 0.0
    %204 = vmatpush.msra.mxu0 0.0
    %205 = vmatpush.msra.mxu0 %v133
    %206 = vmatpush.msra.mxu0 %v129
    %207 = vmatpush.msra.mxu0 %v125
    %208 = vmatpush.msra.mxu0 %v121
    %209 = vmatpush.msra.mxu0 %v117
    %210 = vmatpush.msra.mxu0 %v113
    %211 = vmatpush.msra.mxu0 %v109
    %212 = vmatpush.msra.mxu0 %v105
    %213 = vmatmul.f32.gmra.mxu0 %v146
    %v214 = vpop.f32.mrf.mxu0
    %v215 = vadd.f32 %v139, %v214
    %216 = vmatmul.f32.gmra.mxu0 %v149
    %v217 = vpop.f32.mrf.mxu0
    %v218 = vadd.f32 %v139, %v217
    %219 = vdwg.mxu0
    %220 = vmatpush.msra.mxu0 0.0
    %221 = vmatpush.msra.mxu0 0.0
    %222 = vmatpush.msra.mxu0 0.0
    %223 = vmatpush.msra.mxu0 0.0
    %224 = vmatpush.msra.mxu0 0.0
    %225 = vmatpush.msra.mxu0 0.0
    %226 = vmatpush.msra.mxu0 0.0
    %227 = vmatpush.msra.mxu0 0.0
    %228 = vmatpush.msra.mxu0 %v134
    %229 = vmatpush.msra.mxu0 %v130
    %230 = vmatpush.msra.mxu0 %v126
    %231 = vmatpush.msra.mxu0 %v122
    %232 = vmatpush.msra.mxu0 %v118
    %233 = vmatpush.msra.mxu0 %v114
    %234 = vmatpush.msra.mxu0 %v110
    %235 = vmatpush.msra.mxu0 %v106
    %236 = vmatmul.f32.gmra.mxu0 %v146
    %v237 = vpop.f32.mrf.mxu0
    %v238 = vadd.f32 %v140, %v237
    %239 = vmatmul.f32.gmra.mxu0 %v149
    %v240 = vpop.f32.mrf.mxu0
    %v241 = vadd.f32 %v140, %v240
    %242 = vdwg.mxu0
    %v243 = vld [vmem:[#allocation3] sm:$0xff]
    %v244 = vld [vmem:[#allocation3 + $0x8] sm:$0xff]
    %v245 = vld [vmem:[#allocation3 + $0x10] sm:$0xff]
    %v246 = vld [vmem:[#allocation3 + $0x18] sm:$0xff]
    %v247 = vld [vmem:[#allocation3 + $0x20] sm:$0xff]
    %v248 = vld [vmem:[#allocation3 + $0x28] sm:$0xff]
    %v249 = vld [vmem:[#allocation3 + $0x30] sm:$0xff]
    %v250 = vld [vmem:[#allocation3 + $0x38] sm:$0xff]
    %v251 = vld [vmem:[#allocation3 + $0x40] sm:$0xff]
    %v252 = vld [vmem:[#allocation3 + $0x48] sm:$0xff]
    %v253 = vld [vmem:[#allocation3 + $0x50] sm:$0xff]
    %v254 = vld [vmem:[#allocation3 + $0x58] sm:$0xff]
    %v255 = vld [vmem:[#allocation3 + $0x60] sm:$0xff]
    %v256 = vld [vmem:[#allocation3 + $0x68] sm:$0xff]
    %v257 = vld [vmem:[#allocation3 + $0x70] sm:$0xff]
    %v258 = vld [vmem:[#allocation3 + $0x78] sm:$0xff]
    %v259 = vld [vmem:[#allocation3 + $0x80] sm:$0xff]
    %v260 = vld [vmem:[#allocation3 + $0x88] sm:$0xff]
    %v261 = vld [vmem:[#allocation3 + $0x90] sm:$0xff]
    %v262 = vld [vmem:[#allocation3 + $0x98] sm:$0xff]
    %v263 = vld [vmem:[#allocation3 + $0xa0] sm:$0xff]
    %v264 = vld [vmem:[#allocation3 + $0xa8] sm:$0xff]
    %v265 = vld [vmem:[#allocation3 + $0xb0] sm:$0xff]
    %v266 = vld [vmem:[#allocation3 + $0xb8] sm:$0xff]
    %v267 = vld [vmem:[#allocation3 + $0xc0] sm:$0xff]
    %v268 = vld [vmem:[#allocation3 + $0xc8] sm:$0xff]
    %v269 = vld [vmem:[#allocation3 + $0xd0] sm:$0xff]
    %v270 = vld [vmem:[#allocation3 + $0xd8] sm:$0xff]
    %v271 = vld [vmem:[#allocation3 + $0xe0] sm:$0xff]
    %v272 = vld [vmem:[#allocation3 + $0xe8] sm:$0xff]
    %v273 = vld [vmem:[#allocation3 + $0xf0] sm:$0xff]
    %v274 = vld [vmem:[#allocation3 + $0xf8] sm:$0xff]
    %v275 = vld [vmem:[#allocation3 + $0x100] sm:$0xff]
    %v276 = vld [vmem:[#allocation3 + $0x108] sm:$0xff]
    %v277 = vld [vmem:[#allocation3 + $0x110] sm:$0xff]
    %v278 = vld [vmem:[#allocation3 + $0x118] sm:$0xff]
    %v279 = vld [vmem:[#allocation3 + $0x120] sm:$0xff]
    %v280 = vld [vmem:[#allocation3 + $0x128] sm:$0xff]
    %v281 = vld [vmem:[#allocation3 + $0x130] sm:$0xff]
    %v282 = vld [vmem:[#allocation3 + $0x138] sm:$0xff]
    %v283 = vld [vmem:[#allocation3 + $0x140] sm:$0xff]
    %v284 = vld [vmem:[#allocation3 + $0x148] sm:$0xff]
    %v285 = vld [vmem:[#allocation3 + $0x150] sm:$0xff]
    %v286 = vld [vmem:[#allocation3 + $0x158] sm:$0xff]
    %v287 = vld [vmem:[#allocation3 + $0x160] sm:$0xff]
    %v288 = vld [vmem:[#allocation3 + $0x168] sm:$0xff]
    %v289 = vld [vmem:[#allocation3 + $0x170] sm:$0xff]
    %v290 = vld [vmem:[#allocation3 + $0x178] sm:$0xff]
    %v291 = vld [vmem:[#allocation3 + $0x180] sm:$0xff]
    %v292 = vld [vmem:[#allocation3 + $0x188] sm:$0xff]
    %v293 = vld [vmem:[#allocation3 + $0x190] sm:$0xff]
    %v294 = vld [vmem:[#allocation3 + $0x198] sm:$0xff]
    %v295 = vld [vmem:[#allocation3 + $0x1a0] sm:$0xff]
    %v296 = vld [vmem:[#allocation3 + $0x1a8] sm:$0xff]
    %v297 = vld [vmem:[#allocation3 + $0x1b0] sm:$0xff]
    %v298 = vld [vmem:[#allocation3 + $0x1b8] sm:$0xff]
    %v299 = vld [vmem:[#allocation3 + $0x1c0] sm:$0xff]
    %v300 = vld [vmem:[#allocation3 + $0x1c8] sm:$0xff]
    %v301 = vld [vmem:[#allocation3 + $0x1d0] sm:$0xff]
    %v302 = vld [vmem:[#allocation3 + $0x1d8] sm:$0xff]
    %v303 = vld [vmem:[#allocation3 + $0x1e0] sm:$0xff]
    %v304 = vld [vmem:[#allocation3 + $0x1e8] sm:$0xff]
    %v305 = vld [vmem:[#allocation3 + $0x1f0] sm:$0xff]
    %v306 = vld [vmem:[#allocation3 + $0x1f8] sm:$0xff]
    %307 = vmatpush.msra.mxu0 %v303
    %308 = vmatpush.msra.mxu0 %v299
    %309 = vmatpush.msra.mxu0 %v295
    %310 = vmatpush.msra.mxu0 %v291
    %311 = vmatpush.msra.mxu0 %v287
    %312 = vmatpush.msra.mxu0 %v283
    %313 = vmatpush.msra.mxu0 %v279
    %314 = vmatpush.msra.mxu0 %v275
    %315 = vmatpush.msra.mxu0 %v271
    %316 = vmatpush.msra.mxu0 %v267
    %317 = vmatpush.msra.mxu0 %v263
    %318 = vmatpush.msra.mxu0 %v259
    %319 = vmatpush.msra.mxu0 %v255
    %320 = vmatpush.msra.mxu0 %v251
    %321 = vmatpush.msra.mxu0 %v247
    %322 = vmatpush.msra.mxu0 %v243
    %323 = vmatmul.f32.gmra.mxu0 0.0
    %v324 = vpop.f32.mrf.mxu0
    %v325 = vadd.f32 0.0, %v324
    %326 = vdwg.mxu0
    %327 = vmatpush.msra.mxu0 %v304
    %328 = vmatpush.msra.mxu0 %v300
    %329 = vmatpush.msra.mxu0 %v296
    %330 = vmatpush.msra.mxu0 %v292
    %331 = vmatpush.msra.mxu0 %v288
    %332 = vmatpush.msra.mxu0 %v284
    %333 = vmatpush.msra.mxu0 %v280
    %334 = vmatpush.msra.mxu0 %v276
    %335 = vmatpush.msra.mxu0 %v272
    %336 = vmatpush.msra.mxu0 %v268
    %337 = vmatpush.msra.mxu0 %v264
    %338 = vmatpush.msra.mxu0 %v260
    %339 = vmatpush.msra.mxu0 %v256
    %340 = vmatpush.msra.mxu0 %v252
    %341 = vmatpush.msra.mxu0 %v248
    %342 = vmatpush.msra.mxu0 %v244
    %343 = vmatmul.f32.gmra.mxu0 0.0
    %v344 = vpop.f32.mrf.mxu0
    %v345 = vadd.f32 0.0, %v344
    %346 = vdwg.mxu0
    %347 = vmatpush.msra.mxu0 %v305
    %348 = vmatpush.msra.mxu0 %v301
    %349 = vmatpush.msra.mxu0 %v297
    %350 = vmatpush.msra.mxu0 %v293
    %351 = vmatpush.msra.mxu0 %v289
    %352 = vmatpush.msra.mxu0 %v285
    %353 = vmatpush.msra.mxu0 %v281
    %354 = vmatpush.msra.mxu0 %v277
    %355 = vmatpush.msra.mxu0 %v273
    %356 = vmatpush.msra.mxu0 %v269
    %357 = vmatpush.msra.mxu0 %v265
    %358 = vmatpush.msra.mxu0 %v261
    %359 = vmatpush.msra.mxu0 %v257
    %360 = vmatpush.msra.mxu0 %v253
    %361 = vmatpush.msra.mxu0 %v249
    %362 = vmatpush.msra.mxu0 %v245
    %363 = vmatmul.f32.gmra.mxu0 0.0
    %v364 = vpop.f32.mrf.mxu0
    %v365 = vadd.f32 0.0, %v364
    %366 = vdwg.mxu0
    %367 = vmatpush.msra.mxu0 %v306
    %368 = vmatpush.msra.mxu0 %v302
    %369 = vmatpush.msra.mxu0 %v298
    %370 = vmatpush.msra.mxu0 %v294
    %371 = vmatpush.msra.mxu0 %v290
    %372 = vmatpush.msra.mxu0 %v286
    %373 = vmatpush.msra.mxu0 %v282
    %374 = vmatpush.msra.mxu0 %v278
    %375 = vmatpush.msra.mxu0 %v274
    %376 = vmatpush.msra.mxu0 %v270
    %377 = vmatpush.msra.mxu0 %v266
    %378 = vmatpush.msra.mxu0 %v262
    %379 = vmatpush.msra.mxu0 %v258
    %380 = vmatpush.msra.mxu0 %v254
    %381 = vmatpush.msra.mxu0 %v250
    %382 = vmatpush.msra.mxu0 %v246
    %383 = vmatmul.f32.gmra.mxu0 0.0
    %v384 = vpop.f32.mrf.mxu0
    %v385 = vadd.f32 0.0, %v384
    %386 = vdwg.mxu0
    %v387 = vadd.f32 %v169, %v325
    %v388 = vadd.f32 %v192, %v345
    %v389 = vadd.f32 %v215, %v365
    %v390 = vadd.f32 %v238, %v385
    %v391 = vxor.u32 %v387, 2147483648
    %v392 = vmul.f32 %v391, 1.442695
    %v393 = vpow.pop %v392
    %v394 = vadd.f32 %v393, 1.0
    %v395 = vrcp.pop %v394
    %v396 = vmul.f32 %v394, %v395
    %v397 = vsub.f32 1.0, %v396
    %v398 = vmul.f32 %v395, %v397
    %v399 = vadd.f32 %v395, %v398
    %vm400 = vweird.f32 %v394
    %vm401 = vweird.f32 %v395
    %vm402 = vmor %vm400, %vm401
    %v403 = vsel %vm402, %v395, %v399
    %v404 = vand.u32 2147483647, %v394
    %vm405 = vcmp.eq.f32.partialorder %v404, 8.507059e+37
    %v406 = vand.u32 %v394, 2147483648
    %v407 = vor.u32 1.1754944e-38, %v406
    %v408 = vsel %vm405, %v407, %v403
    %v409 = vmul.f32 1.0, %v408
    %v410 = vxor.u32 %v388, 2147483648
    %v411 = vmul.f32 %v410, 1.442695
    %v412 = vpow.pop %v411
    %v413 = vadd.f32 %v412, 1.0
    %v414 = vrcp.pop %v413
    %v415 = vmul.f32 %v413, %v414
    %v416 = vsub.f32 1.0, %v415
    %v417 = vmul.f32 %v414, %v416
    %v418 = vadd.f32 %v414, %v417
    %vm419 = vweird.f32 %v413
    %vm420 = vweird.f32 %v414
    %vm421 = vmor %vm419, %vm420
    %v422 = vsel %vm421, %v414, %v418
    %v423 = vand.u32 2147483647, %v413
    %vm424 = vcmp.eq.f32.partialorder %v423, 8.507059e+37
    %v425 = vand.u32 %v413, 2147483648
    %v426 = vor.u32 1.1754944e-38, %v425
    %v427 = vsel %vm424, %v426, %v422
    %v428 = vmul.f32 1.0, %v427
    %v429 = vtanh.pop %v389
    %v430 = vxor.u32 %v390, 2147483648
    %v431 = vmul.f32 %v430, 1.442695
    %v432 = vpow.pop %v431
    %v433 = vadd.f32 %v432, 1.0
    %v434 = vrcp.pop %v433
    %v435 = vmul.f32 %v433, %v434
    %v436 = vsub.f32 1.0, %v435
    %v437 = vmul.f32 %v434, %v436
    %v438 = vadd.f32 %v434, %v437
    %vm439 = vweird.f32 %v433
    %vm440 = vweird.f32 %v434
    %vm441 = vmor %vm439, %vm440
    %v442 = vsel %vm441, %v434, %v438
    %v443 = vand.u32 2147483647, %v433
    %vm444 = vcmp.eq.f32.partialorder %v443, 8.507059e+37
    %v445 = vand.u32 %v433, 2147483648
    %v446 = vor.u32 1.1754944e-38, %v445
    %v447 = vsel %vm444, %v446, %v442
    %v448 = vmul.f32 1.0, %v447
    %v449 = vmul.f32 %v428, 0.0
    %v450 = vmul.f32 %v409, %v429
    %v451 = vadd.f32 %v449, %v450
    %v452 = vtanh.pop %v451
    %v453 = vmul.f32 %v448, %v452
    %454 = vst [vmem:[#allocation2] sm:$0x3] %v453
    %455 = vmatpush.msra.mxu0 %v303
    %456 = vmatpush.msra.mxu0 %v299
    %457 = vmatpush.msra.mxu0 %v295
    %458 = vmatpush.msra.mxu0 %v291
    %459 = vmatpush.msra.mxu0 %v287
    %460 = vmatpush.msra.mxu0 %v283
    %461 = vmatpush.msra.mxu0 %v279
    %462 = vmatpush.msra.mxu0 %v275
    %463 = vmatpush.msra.mxu0 %v271
    %464 = vmatpush.msra.mxu0 %v267
    %465 = vmatpush.msra.mxu0 %v263
    %466 = vmatpush.msra.mxu0 %v259
    %467 = vmatpush.msra.mxu0 %v255
    %468 = vmatpush.msra.mxu0 %v251
    %469 = vmatpush.msra.mxu0 %v247
    %470 = vmatpush.msra.mxu0 %v243
    %471 = vmatmul.f32.gmra.mxu0 %v453
    %v472 = vpop.f32.mrf.mxu0
    %v473 = vadd.f32 0.0, %v472
    %474 = vdwg.mxu0
    %475 = vmatpush.msra.mxu0 %v304
    %476 = vmatpush.msra.mxu0 %v300
    %477 = vmatpush.msra.mxu0 %v296
    %478 = vmatpush.msra.mxu0 %v292
    %479 = vmatpush.msra.mxu0 %v288
    %480 = vmatpush.msra.mxu0 %v284
    %481 = vmatpush.msra.mxu0 %v280
    %482 = vmatpush.msra.mxu0 %v276
    %483 = vmatpush.msra.mxu0 %v272
    %484 = vmatpush.msra.mxu0 %v268
    %485 = vmatpush.msra.mxu0 %v264
    %486 = vmatpush.msra.mxu0 %v260
    %487 = vmatpush.msra.mxu0 %v256
    %488 = vmatpush.msra.mxu0 %v252
    %489 = vmatpush.msra.mxu0 %v248
    %490 = vmatpush.msra.mxu0 %v244
    %491 = vmatmul.f32.gmra.mxu0 %v453
    %v492 = vpop.f32.mrf.mxu0
    %v493 = vadd.f32 0.0, %v492
    %494 = vdwg.mxu0
    %495 = vmatpush.msra.mxu0 %v305
    %496 = vmatpush.msra.mxu0 %v301
    %497 = vmatpush.msra.mxu0 %v297
    %498 = vmatpush.msra.mxu0 %v293
    %499 = vmatpush.msra.mxu0 %v289
    %500 = vmatpush.msra.mxu0 %v285
    %501 = vmatpush.msra.mxu0 %v281
    %502 = vmatpush.msra.mxu0 %v277
    %503 = vmatpush.msra.mxu0 %v273
    %504 = vmatpush.msra.mxu0 %v269
    %505 = vmatpush.msra.mxu0 %v265
    %506 = vmatpush.msra.mxu0 %v261
    %507 = vmatpush.msra.mxu0 %v257
    %508 = vmatpush.msra.mxu0 %v253
    %509 = vmatpush.msra.mxu0 %v249
    %510 = vmatpush.msra.mxu0 %v245
    %511 = vmatmul.f32.gmra.mxu0 %v453
    %v512 = vpop.f32.mrf.mxu0
    %v513 = vadd.f32 0.0, %v512
    %514 = vdwg.mxu0
    %515 = vmatpush.msra.mxu0 %v306
    %516 = vmatpush.msra.mxu0 %v302
    %517 = vmatpush.msra.mxu0 %v298
    %518 = vmatpush.msra.mxu0 %v294
    %519 = vmatpush.msra.mxu0 %v290
    %520 = vmatpush.msra.mxu0 %v286
    %521 = vmatpush.msra.mxu0 %v282
    %522 = vmatpush.msra.mxu0 %v278
    %523 = vmatpush.msra.mxu0 %v274
    %524 = vmatpush.msra.mxu0 %v270
    %525 = vmatpush.msra.mxu0 %v266
    %526 = vmatpush.msra.mxu0 %v262
    %527 = vmatpush.msra.mxu0 %v258
    %528 = vmatpush.msra.mxu0 %v254
    %529 = vmatpush.msra.mxu0 %v250
    %530 = vmatpush.msra.mxu0 %v246
    %531 = vmatmul.f32.gmra.mxu0 %v453
    %v532 = vpop.f32.mrf.mxu0
    %v533 = vadd.f32 0.0, %v532
    %534 = vdwg.mxu0
    %v539 = vrot.slane %v473, 6
    %v540 = vrot.slane %v493, 6
    %v541 = vrot.slane %v513, 6
    %v542 = vrot.slane %v533, 6
    %v547 = vadd.f32 %v169, %v539
    %v548 = vadd.f32 %v192, %v540
    %v549 = vadd.f32 %v215, %v541
    %v550 = vadd.f32 %v238, %v542
    %v551 = vxor.u32 %v547, 2147483648
    %v552 = vmul.f32 %v551, 1.442695
    %v553 = vpow.pop %v552
    %v554 = vadd.f32 %v553, 1.0
    %v555 = vrcp.pop %v554
    %v556 = vmul.f32 %v554, %v555
    %v557 = vsub.f32 1.0, %v556
    %v558 = vmul.f32 %v555, %v557
    %v559 = vadd.f32 %v555, %v558
    %vm560 = vweird.f32 %v554
    %vm561 = vweird.f32 %v555
    %vm562 = vmor %vm560, %vm561
    %v563 = vsel %vm562, %v555, %v559
    %v564 = vand.u32 2147483647, %v554
    %vm565 = vcmp.eq.f32.partialorder %v564, 8.507059e+37
    %v566 = vand.u32 %v554, 2147483648
    %v567 = vor.u32 1.1754944e-38, %v566
    %v568 = vsel %vm565, %v567, %v563
    %v569 = vmul.f32 1.0, %v568
    %v570 = vxor.u32 %v548, 2147483648
    %v571 = vmul.f32 %v570, 1.442695
    %v572 = vpow.pop %v571
    %v573 = vadd.f32 %v572, 1.0
    %v574 = vrcp.pop %v573
    %v575 = vmul.f32 %v573, %v574
    %v576 = vsub.f32 1.0, %v575
    %v577 = vmul.f32 %v574, %v576
    %v578 = vadd.f32 %v574, %v577
    %vm579 = vweird.f32 %v573
    %vm580 = vweird.f32 %v574
    %vm581 = vmor %vm579, %vm580
    %v582 = vsel %vm581, %v574, %v578
    %v583 = vand.u32 2147483647, %v573
    %vm584 = vcmp.eq.f32.partialorder %v583, 8.507059e+37
    %v585 = vand.u32 %v573, 2147483648
    %v586 = vor.u32 1.1754944e-38, %v585
    %v587 = vsel %vm584, %v586, %v582
    %v588 = vmul.f32 1.0, %v587
    %v589 = vtanh.pop %v549
    %v590 = vxor.u32 %v550, 2147483648
    %v591 = vmul.f32 %v590, 1.442695
    %v592 = vpow.pop %v591
    %v593 = vadd.f32 %v592, 1.0
    %v594 = vrcp.pop %v593
    %v595 = vmul.f32 %v593, %v594
    %v596 = vsub.f32 1.0, %v595
    %v597 = vmul.f32 %v594, %v596
    %v598 = vadd.f32 %v594, %v597
    %vm599 = vweird.f32 %v593
    %vm600 = vweird.f32 %v594
    %vm601 = vmor %vm599, %vm600
    %v602 = vsel %vm601, %v594, %v598
    %v603 = vand.u32 2147483647, %v593
    %vm604 = vcmp.eq.f32.partialorder %v603, 8.507059e+37
    %v605 = vand.u32 %v593, 2147483648
    %v606 = vor.u32 1.1754944e-38, %v605
    %v607 = vsel %vm604, %v606, %v602
    %v608 = vmul.f32 1.0, %v607
    %v610 = vrot.slane %v451, 6
    %v612 = vmul.f32 %v588, %v610
    %v613 = vmul.f32 %v569, %v589
    %v614 = vadd.f32 %v612, %v613
    %v615 = vtanh.pop %v614
    %v616 = vmul.f32 %v608, %v615
    %617 = vst [vmem:[#allocation2] sm:$0xc] %v616
    %v619 = vrot.slane %v616, 2
    %621 = vmatpush.msra.mxu0 %v303
    %622 = vmatpush.msra.mxu0 %v299
    %623 = vmatpush.msra.mxu0 %v295
    %624 = vmatpush.msra.mxu0 %v291
    %625 = vmatpush.msra.mxu0 %v287
    %626 = vmatpush.msra.mxu0 %v283
    %627 = vmatpush.msra.mxu0 %v279
    %628 = vmatpush.msra.mxu0 %v275
    %629 = vmatpush.msra.mxu0 %v271
    %630 = vmatpush.msra.mxu0 %v267
    %631 = vmatpush.msra.mxu0 %v263
    %632 = vmatpush.msra.mxu0 %v259
    %633 = vmatpush.msra.mxu0 %v255
    %634 = vmatpush.msra.mxu0 %v251
    %635 = vmatpush.msra.mxu0 %v247
    %636 = vmatpush.msra.mxu0 %v243
    %637 = vmatmul.f32.gmra.mxu0 %v619
    %v638 = vpop.f32.mrf.mxu0
    %v639 = vadd.f32 0.0, %v638
    %640 = vdwg.mxu0
    %641 = vmatpush.msra.mxu0 %v304
    %642 = vmatpush.msra.mxu0 %v300
    %643 = vmatpush.msra.mxu0 %v296
    %644 = vmatpush.msra.mxu0 %v292
    %645 = vmatpush.msra.mxu0 %v288
    %646 = vmatpush.msra.mxu0 %v284
    %647 = vmatpush.msra.mxu0 %v280
    %648 = vmatpush.msra.mxu0 %v276
    %649 = vmatpush.msra.mxu0 %v272
    %650 = vmatpush.msra.mxu0 %v268
    %651 = vmatpush.msra.mxu0 %v264
    %652 = vmatpush.msra.mxu0 %v260
    %653 = vmatpush.msra.mxu0 %v256
    %654 = vmatpush.msra.mxu0 %v252
    %655 = vmatpush.msra.mxu0 %v248
    %656 = vmatpush.msra.mxu0 %v244
    %657 = vmatmul.f32.gmra.mxu0 %v619
    %v658 = vpop.f32.mrf.mxu0
    %v659 = vadd.f32 0.0, %v658
    %660 = vdwg.mxu0
    %661 = vmatpush.msra.mxu0 %v305
    %662 = vmatpush.msra.mxu0 %v301
    %663 = vmatpush.msra.mxu0 %v297
    %664 = vmatpush.msra.mxu0 %v293
    %665 = vmatpush.msra.mxu0 %v289
    %666 = vmatpush.msra.mxu0 %v285
    %667 = vmatpush.msra.mxu0 %v281
    %668 = vmatpush.msra.mxu0 %v277
    %669 = vmatpush.msra.mxu0 %v273
    %670 = vmatpush.msra.mxu0 %v269
    %671 = vmatpush.msra.mxu0 %v265
    %672 = vmatpush.msra.mxu0 %v261
    %673 = vmatpush.msra.mxu0 %v257
    %674 = vmatpush.msra.mxu0 %v253
    %675 = vmatpush.msra.mxu0 %v249
    %676 = vmatpush.msra.mxu0 %v245
    %677 = vmatmul.f32.gmra.mxu0 %v619
    %v678 = vpop.f32.mrf.mxu0
    %v679 = vadd.f32 0.0, %v678
    %680 = vdwg.mxu0
    %681 = vmatpush.msra.mxu0 %v306
    %682 = vmatpush.msra.mxu0 %v302
    %683 = vmatpush.msra.mxu0 %v298
    %684 = vmatpush.msra.mxu0 %v294
    %685 = vmatpush.msra.mxu0 %v290
    %686 = vmatpush.msra.mxu0 %v286
    %687 = vmatpush.msra.mxu0 %v282
    %688 = vmatpush.msra.mxu0 %v278
    %689 = vmatpush.msra.mxu0 %v274
    %690 = vmatpush.msra.mxu0 %v270
    %691 = vmatpush.msra.mxu0 %v266
    %692 = vmatpush.msra.mxu0 %v262
    %693 = vmatpush.msra.mxu0 %v258
    %694 = vmatpush.msra.mxu0 %v254
    %695 = vmatpush.msra.mxu0 %v250
    %696 = vmatpush.msra.mxu0 %v246
    %697 = vmatmul.f32.gmra.mxu0 %v619
    %v698 = vpop.f32.mrf.mxu0
    %v699 = vadd.f32 0.0, %v698
    %700 = vdwg.mxu0
    %v705 = vrot.slane %v639, 4
    %v706 = vrot.slane %v659, 4
    %v707 = vrot.slane %v679, 4
    %v708 = vrot.slane %v699, 4
    %v713 = vadd.f32 %v169, %v705
    %v714 = vadd.f32 %v192, %v706
    %v715 = vadd.f32 %v215, %v707
    %v716 = vadd.f32 %v238, %v708
    %v717 = vxor.u32 %v713, 2147483648
    %v718 = vmul.f32 %v717, 1.442695
    %v719 = vpow.pop %v718
    %v720 = vadd.f32 %v719, 1.0
    %v721 = vrcp.pop %v720
    %v722 = vmul.f32 %v720, %v721
    %v723 = vsub.f32 1.0, %v722
    %v724 = vmul.f32 %v721, %v723
    %v725 = vadd.f32 %v721, %v724
    %vm726 = vweird.f32 %v720
    %vm727 = vweird.f32 %v721
    %vm728 = vmor %vm726, %vm727
    %v729 = vsel %vm728, %v721, %v725
    %v730 = vand.u32 2147483647, %v720
    %vm731 = vcmp.eq.f32.partialorder %v730, 8.507059e+37
    %v732 = vand.u32 %v720, 2147483648
    %v733 = vor.u32 1.1754944e-38, %v732
    %v734 = vsel %vm731, %v733, %v729
    %v735 = vmul.f32 1.0, %v734
    %v736 = vxor.u32 %v714, 2147483648
    %v737 = vmul.f32 %v736, 1.442695
    %v738 = vpow.pop %v737
    %v739 = vadd.f32 %v738, 1.0
    %v740 = vrcp.pop %v739
    %v741 = vmul.f32 %v739, %v740
    %v742 = vsub.f32 1.0, %v741
    %v743 = vmul.f32 %v740, %v742
    %v744 = vadd.f32 %v740, %v743
    %vm745 = vweird.f32 %v739
    %vm746 = vweird.f32 %v740
    %vm747 = vmor %vm745, %vm746
    %v748 = vsel %vm747, %v740, %v744
    %v749 = vand.u32 2147483647, %v739
    %vm750 = vcmp.eq.f32.partialorder %v749, 8.507059e+37
    %v751 = vand.u32 %v739, 2147483648
    %v752 = vor.u32 1.1754944e-38, %v751
    %v753 = vsel %vm750, %v752, %v748
    %v754 = vmul.f32 1.0, %v753
    %v755 = vtanh.pop %v715
    %v756 = vxor.u32 %v716, 2147483648
    %v757 = vmul.f32 %v756, 1.442695
    %v758 = vpow.pop %v757
    %v759 = vadd.f32 %v758, 1.0
    %v760 = vrcp.pop %v759
    %v761 = vmul.f32 %v759, %v760
    %v762 = vsub.f32 1.0, %v761
    %v763 = vmul.f32 %v760, %v762
    %v764 = vadd.f32 %v760, %v763
    %vm765 = vweird.f32 %v759
    %vm766 = vweird.f32 %v760
    %vm767 = vmor %vm765, %vm766
    %v768 = vsel %vm767, %v760, %v764
    %v769 = vand.u32 2147483647, %v759
    %vm770 = vcmp.eq.f32.partialorder %v769, 8.507059e+37
    %v771 = vand.u32 %v759, 2147483648
    %v772 = vor.u32 1.1754944e-38, %v771
    %v773 = vsel %vm770, %v772, %v768
    %v774 = vmul.f32 1.0, %v773
    %v776 = vrot.slane %v614, 6
    %v778 = vmul.f32 %v754, %v776
    %v779 = vmul.f32 %v735, %v755
    %v780 = vadd.f32 %v778, %v779
    %v781 = vtanh.pop %v780
    %v782 = vmul.f32 %v774, %v781
    %783 = vst [vmem:[#allocation2] sm:$0x30] %v782
    %v785 = vrot.slane %v782, 4
    %787 = vmatpush.msra.mxu0 %v303
    %788 = vmatpush.msra.mxu0 %v299
    %789 = vmatpush.msra.mxu0 %v295
    %790 = vmatpush.msra.mxu0 %v291
    %791 = vmatpush.msra.mxu0 %v287
    %792 = vmatpush.msra.mxu0 %v283
    %793 = vmatpush.msra.mxu0 %v279
    %794 = vmatpush.msra.mxu0 %v275
    %795 = vmatpush.msra.mxu0 %v271
    %796 = vmatpush.msra.mxu0 %v267
    %797 = vmatpush.msra.mxu0 %v263
    %798 = vmatpush.msra.mxu0 %v259
    %799 = vmatpush.msra.mxu0 %v255
    %800 = vmatpush.msra.mxu0 %v251
    %801 = vmatpush.msra.mxu0 %v247
    %802 = vmatpush.msra.mxu0 %v243
    %803 = vmatmul.f32.gmra.mxu0 %v785
    %v804 = vpop.f32.mrf.mxu0
    %v805 = vadd.f32 0.0, %v804
    %806 = vdwg.mxu0
    %807 = vmatpush.msra.mxu0 %v304
    %808 = vmatpush.msra.mxu0 %v300
    %809 = vmatpush.msra.mxu0 %v296
    %810 = vmatpush.msra.mxu0 %v292
    %811 = vmatpush.msra.mxu0 %v288
    %812 = vmatpush.msra.mxu0 %v284
    %813 = vmatpush.msra.mxu0 %v280
    %814 = vmatpush.msra.mxu0 %v276
    %815 = vmatpush.msra.mxu0 %v272
    %816 = vmatpush.msra.mxu0 %v268
    %817 = vmatpush.msra.mxu0 %v264
    %818 = vmatpush.msra.mxu0 %v260
    %819 = vmatpush.msra.mxu0 %v256
    %820 = vmatpush.msra.mxu0 %v252
    %821 = vmatpush.msra.mxu0 %v248
    %822 = vmatpush.msra.mxu0 %v244
    %823 = vmatmul.f32.gmra.mxu0 %v785
    %v824 = vpop.f32.mrf.mxu0
    %v825 = vadd.f32 0.0, %v824
    %826 = vdwg.mxu0
    %827 = vmatpush.msra.mxu0 %v305
    %828 = vmatpush.msra.mxu0 %v301
    %829 = vmatpush.msra.mxu0 %v297
    %830 = vmatpush.msra.mxu0 %v293
    %831 = vmatpush.msra.mxu0 %v289
    %832 = vmatpush.msra.mxu0 %v285
    %833 = vmatpush.msra.mxu0 %v281
    %834 = vmatpush.msra.mxu0 %v277
    %835 = vmatpush.msra.mxu0 %v273
    %836 = vmatpush.msra.mxu0 %v269
    %837 = vmatpush.msra.mxu0 %v265
    %838 = vmatpush.msra.mxu0 %v261
    %839 = vmatpush.msra.mxu0 %v257
    %840 = vmatpush.msra.mxu0 %v253
    %841 = vmatpush.msra.mxu0 %v249
    %842 = vmatpush.msra.mxu0 %v245
    %843 = vmatmul.f32.gmra.mxu0 %v785
    %v844 = vpop.f32.mrf.mxu0
    %v845 = vadd.f32 0.0, %v844
    %846 = vdwg.mxu0
    %847 = vmatpush.msra.mxu0 %v306
    %848 = vmatpush.msra.mxu0 %v302
    %849 = vmatpush.msra.mxu0 %v298
    %850 = vmatpush.msra.mxu0 %v294
    %851 = vmatpush.msra.mxu0 %v290
    %852 = vmatpush.msra.mxu0 %v286
    %853 = vmatpush.msra.mxu0 %v282
    %854 = vmatpush.msra.mxu0 %v278
    %855 = vmatpush.msra.mxu0 %v274
    %856 = vmatpush.msra.mxu0 %v270
    %857 = vmatpush.msra.mxu0 %v266
    %858 = vmatpush.msra.mxu0 %v262
    %859 = vmatpush.msra.mxu0 %v258
    %860 = vmatpush.msra.mxu0 %v254
    %861 = vmatpush.msra.mxu0 %v250
    %862 = vmatpush.msra.mxu0 %v246
    %863 = vmatmul.f32.gmra.mxu0 %v785
    %v864 = vpop.f32.mrf.mxu0
    %v865 = vadd.f32 0.0, %v864
    %866 = vdwg.mxu0
    %v871 = vrot.slane %v805, 2
    %v872 = vrot.slane %v825, 2
    %v873 = vrot.slane %v845, 2
    %v874 = vrot.slane %v865, 2
    %v879 = vadd.f32 %v169, %v871
    %v880 = vadd.f32 %v192, %v872
    %v881 = vadd.f32 %v215, %v873
    %v882 = vadd.f32 %v238, %v874
    %v883 = vxor.u32 %v879, 2147483648
    %v884 = vmul.f32 %v883, 1.442695
    %v885 = vpow.pop %v884
    %v886 = vadd.f32 %v885, 1.0
    %v887 = vrcp.pop %v886
    %v888 = vmul.f32 %v886, %v887
    %v889 = vsub.f32 1.0, %v888
    %v890 = vmul.f32 %v887, %v889
    %v891 = vadd.f32 %v887, %v890
    %vm892 = vweird.f32 %v886
    %vm893 = vweird.f32 %v887
    %vm894 = vmor %vm892, %vm893
    %v895 = vsel %vm894, %v887, %v891
    %v896 = vand.u32 2147483647, %v886
    %vm897 = vcmp.eq.f32.partialorder %v896, 8.507059e+37
    %v898 = vand.u32 %v886, 2147483648
    %v899 = vor.u32 1.1754944e-38, %v898
    %v900 = vsel %vm897, %v899, %v895
    %v901 = vmul.f32 1.0, %v900
    %v902 = vxor.u32 %v880, 2147483648
    %v903 = vmul.f32 %v902, 1.442695
    %v904 = vpow.pop %v903
    %v905 = vadd.f32 %v904, 1.0
    %v906 = vrcp.pop %v905
    %v907 = vmul.f32 %v905, %v906
    %v908 = vsub.f32 1.0, %v907
    %v909 = vmul.f32 %v906, %v908
    %v910 = vadd.f32 %v906, %v909
    %vm911 = vweird.f32 %v905
    %vm912 = vweird.f32 %v906
    %vm913 = vmor %vm911, %vm912
    %v914 = vsel %vm913, %v906, %v910
    %v915 = vand.u32 2147483647, %v905
    %vm916 = vcmp.eq.f32.partialorder %v915, 8.507059e+37
    %v917 = vand.u32 %v905, 2147483648
    %v918 = vor.u32 1.1754944e-38, %v917
    %v919 = vsel %vm916, %v918, %v914
    %v920 = vmul.f32 1.0, %v919
    %v921 = vtanh.pop %v881
    %v922 = vxor.u32 %v882, 2147483648
    %v923 = vmul.f32 %v922, 1.442695
    %v924 = vpow.pop %v923
    %v925 = vadd.f32 %v924, 1.0
    %v926 = vrcp.pop %v925
    %v927 = vmul.f32 %v925, %v926
    %v928 = vsub.f32 1.0, %v927
    %v929 = vmul.f32 %v926, %v928
    %v930 = vadd.f32 %v926, %v929
    %vm931 = vweird.f32 %v925
    %vm932 = vweird.f32 %v926
    %vm933 = vmor %vm931, %vm932
    %v934 = vsel %vm933, %v926, %v930
    %v935 = vand.u32 2147483647, %v925
    %vm936 = vcmp.eq.f32.partialorder %v935, 8.507059e+37
    %v937 = vand.u32 %v925, 2147483648
    %v938 = vor.u32 1.1754944e-38, %v937
    %v939 = vsel %vm936, %v938, %v934
    %v940 = vmul.f32 1.0, %v939
    %v942 = vrot.slane %v780, 6
    %v944 = vmul.f32 %v920, %v942
    %v945 = vmul.f32 %v901, %v921
    %v946 = vadd.f32 %v944, %v945
    %v947 = vtanh.pop %v946
    %v948 = vmul.f32 %v940, %v947
    %949 = vst [vmem:[#allocation2] sm:$0xc0] %v948
    %v951 = vrot.slane %v948, 6
    %953 = vmatpush.msra.mxu0 %v303
    %954 = vmatpush.msra.mxu0 %v299
    %955 = vmatpush.msra.mxu0 %v295
    %956 = vmatpush.msra.mxu0 %v291
    %957 = vmatpush.msra.mxu0 %v287
    %958 = vmatpush.msra.mxu0 %v283
    %959 = vmatpush.msra.mxu0 %v279
    %960 = vmatpush.msra.mxu0 %v275
    %961 = vmatpush.msra.mxu0 %v271
    %962 = vmatpush.msra.mxu0 %v267
    %963 = vmatpush.msra.mxu0 %v263
    %964 = vmatpush.msra.mxu0 %v259
    %965 = vmatpush.msra.mxu0 %v255
    %966 = vmatpush.msra.mxu0 %v251
    %967 = vmatpush.msra.mxu0 %v247
    %968 = vmatpush.msra.mxu0 %v243
    %969 = vmatmul.f32.gmra.mxu0 %v951
    %v970 = vpop.f32.mrf.mxu0
    %v971 = vadd.f32 0.0, %v970
    %972 = vdwg.mxu0
    %973 = vmatpush.msra.mxu0 %v304
    %974 = vmatpush.msra.mxu0 %v300
    %975 = vmatpush.msra.mxu0 %v296
    %976 = vmatpush.msra.mxu0 %v292
    %977 = vmatpush.msra.mxu0 %v288
    %978 = vmatpush.msra.mxu0 %v284
    %979 = vmatpush.msra.mxu0 %v280
    %980 = vmatpush.msra.mxu0 %v276
    %981 = vmatpush.msra.mxu0 %v272
    %982 = vmatpush.msra.mxu0 %v268
    %983 = vmatpush.msra.mxu0 %v264
    %984 = vmatpush.msra.mxu0 %v260
    %985 = vmatpush.msra.mxu0 %v256
    %986 = vmatpush.msra.mxu0 %v252
    %987 = vmatpush.msra.mxu0 %v248
    %988 = vmatpush.msra.mxu0 %v244
    %989 = vmatmul.f32.gmra.mxu0 %v951
    %v990 = vpop.f32.mrf.mxu0
    %v991 = vadd.f32 0.0, %v990
    %992 = vdwg.mxu0
    %993 = vmatpush.msra.mxu0 %v305
    %994 = vmatpush.msra.mxu0 %v301
    %995 = vmatpush.msra.mxu0 %v297
    %996 = vmatpush.msra.mxu0 %v293
    %997 = vmatpush.msra.mxu0 %v289
    %998 = vmatpush.msra.mxu0 %v285
    %999 = vmatpush.msra.mxu0 %v281
    %1000 = vmatpush.msra.mxu0 %v277
    %1001 = vmatpush.msra.mxu0 %v273
    %1002 = vmatpush.msra.mxu0 %v269
    %1003 = vmatpush.msra.mxu0 %v265
    %1004 = vmatpush.msra.mxu0 %v261
    %1005 = vmatpush.msra.mxu0 %v257
    %1006 = vmatpush.msra.mxu0 %v253
    %1007 = vmatpush.msra.mxu0 %v249
    %1008 = vmatpush.msra.mxu0 %v245
    %1009 = vmatmul.f32.gmra.mxu0 %v951
    %v1010 = vpop.f32.mrf.mxu0
    %v1011 = vadd.f32 0.0, %v1010
    %1012 = vdwg.mxu0
    %1013 = vmatpush.msra.mxu0 %v306
    %1014 = vmatpush.msra.mxu0 %v302
    %1015 = vmatpush.msra.mxu0 %v298
    %1016 = vmatpush.msra.mxu0 %v294
    %1017 = vmatpush.msra.mxu0 %v290
    %1018 = vmatpush.msra.mxu0 %v286
    %1019 = vmatpush.msra.mxu0 %v282
    %1020 = vmatpush.msra.mxu0 %v278
    %1021 = vmatpush.msra.mxu0 %v274
    %1022 = vmatpush.msra.mxu0 %v270
    %1023 = vmatpush.msra.mxu0 %v266
    %1024 = vmatpush.msra.mxu0 %v262
    %1025 = vmatpush.msra.mxu0 %v258
    %1026 = vmatpush.msra.mxu0 %v254
    %1027 = vmatpush.msra.mxu0 %v250
    %1028 = vmatpush.msra.mxu0 %v246
    %1029 = vmatmul.f32.gmra.mxu0 %v951
    %v1030 = vpop.f32.mrf.mxu0
    %v1031 = vadd.f32 0.0, %v1030
    %1032 = vdwg.mxu0
    %v1033 = vadd.f32 %v172, %v971
    %v1034 = vadd.f32 %v195, %v991
    %v1035 = vadd.f32 %v218, %v1011
    %v1036 = vadd.f32 %v241, %v1031
    %v1037 = vxor.u32 %v1033, 2147483648
    %v1038 = vmul.f32 %v1037, 1.442695
    %v1039 = vpow.pop %v1038
    %v1040 = vadd.f32 %v1039, 1.0
    %v1041 = vrcp.pop %v1040
    %v1042 = vmul.f32 %v1040, %v1041
    %v1043 = vsub.f32 1.0, %v1042
    %v1044 = vmul.f32 %v1041, %v1043
    %v1045 = vadd.f32 %v1041, %v1044
    %vm1046 = vweird.f32 %v1040
    %vm1047 = vweird.f32 %v1041
    %vm1048 = vmor %vm1046, %vm1047
    %v1049 = vsel %vm1048, %v1041, %v1045
    %v1050 = vand.u32 2147483647, %v1040
    %vm1051 = vcmp.eq.f32.partialorder %v1050, 8.507059e+37
    %v1052 = vand.u32 %v1040, 2147483648
    %v1053 = vor.u32 1.1754944e-38, %v1052
    %v1054 = vsel %vm1051, %v1053, %v1049
    %v1055 = vmul.f32 1.0, %v1054
    %v1056 = vxor.u32 %v1034, 2147483648
    %v1057 = vmul.f32 %v1056, 1.442695
    %v1058 = vpow.pop %v1057
    %v1059 = vadd.f32 %v1058, 1.0
    %v1060 = vrcp.pop %v1059
    %v1061 = vmul.f32 %v1059, %v1060
    %v1062 = vsub.f32 1.0, %v1061
    %v1063 = vmul.f32 %v1060, %v1062
    %v1064 = vadd.f32 %v1060, %v1063
    %vm1065 = vweird.f32 %v1059
    %vm1066 = vweird.f32 %v1060
    %vm1067 = vmor %vm1065, %vm1066
    %v1068 = vsel %vm1067, %v1060, %v1064
    %v1069 = vand.u32 2147483647, %v1059
    %vm1070 = vcmp.eq.f32.partialorder %v1069, 8.507059e+37
    %v1071 = vand.u32 %v1059, 2147483648
    %v1072 = vor.u32 1.1754944e-38, %v1071
    %v1073 = vsel %vm1070, %v1072, %v1068
    %v1074 = vmul.f32 1.0, %v1073
    %v1075 = vtanh.pop %v1035
    %v1076 = vxor.u32 %v1036, 2147483648
    %v1077 = vmul.f32 %v1076, 1.442695
    %v1078 = vpow.pop %v1077
    %v1079 = vadd.f32 %v1078, 1.0
    %v1080 = vrcp.pop %v1079
    %v1081 = vmul.f32 %v1079, %v1080
    %v1082 = vsub.f32 1.0, %v1081
    %v1083 = vmul.f32 %v1080, %v1082
    %v1084 = vadd.f32 %v1080, %v1083
    %vm1085 = vweird.f32 %v1079
    %vm1086 = vweird.f32 %v1080
    %vm1087 = vmor %vm1085, %vm1086
    %v1088 = vsel %vm1087, %v1080, %v1084
    %v1089 = vand.u32 2147483647, %v1079
    %vm1090 = vcmp.eq.f32.partialorder %v1089, 8.507059e+37
    %v1091 = vand.u32 %v1079, 2147483648
    %v1092 = vor.u32 1.1754944e-38, %v1091
    %v1093 = vsel %vm1090, %v1092, %v1088
    %v1094 = vmul.f32 1.0, %v1093
    %v1096 = vrot.slane %v946, 6
    %v1098 = vmul.f32 %v1074, %v1096
    %v1099 = vmul.f32 %v1055, %v1075
    %v1100 = vadd.f32 %v1098, %v1099
    %v1101 = vtanh.pop %v1100
    %v1102 = vmul.f32 %v1094, %v1101
    %1103 = vst [vmem:[#allocation2 + $0x8] sm:$0x3] %v1102
    %1104 = vmatpush.msra.mxu0 %v303
    %1105 = vmatpush.msra.mxu0 %v299
    %1106 = vmatpush.msra.mxu0 %v295
    %1107 = vmatpush.msra.mxu0 %v291
    %1108 = vmatpush.msra.mxu0 %v287
    %1109 = vmatpush.msra.mxu0 %v283
    %1110 = vmatpush.msra.mxu0 %v279
    %1111 = vmatpush.msra.mxu0 %v275
    %1112 = vmatpush.msra.mxu0 %v271
    %1113 = vmatpush.msra.mxu0 %v267
    %1114 = vmatpush.msra.mxu0 %v263
    %1115 = vmatpush.msra.mxu0 %v259
    %1116 = vmatpush.msra.mxu0 %v255
    %1117 = vmatpush.msra.mxu0 %v251
    %1118 = vmatpush.msra.mxu0 %v247
    %1119 = vmatpush.msra.mxu0 %v243
    %1120 = vmatmul.f32.gmra.mxu0 %v1102
    %v1121 = vpop.f32.mrf.mxu0
    %v1122 = vadd.f32 0.0, %v1121
    %1123 = vdwg.mxu0
    %1124 = vmatpush.msra.mxu0 %v304
    %1125 = vmatpush.msra.mxu0 %v300
    %1126 = vmatpush.msra.mxu0 %v296
    %1127 = vmatpush.msra.mxu0 %v292
    %1128 = vmatpush.msra.mxu0 %v288
    %1129 = vmatpush.msra.mxu0 %v284
    %1130 = vmatpush.msra.mxu0 %v280
    %1131 = vmatpush.msra.mxu0 %v276
    %1132 = vmatpush.msra.mxu0 %v272
    %1133 = vmatpush.msra.mxu0 %v268
    %1134 = vmatpush.msra.mxu0 %v264
    %1135 = vmatpush.msra.mxu0 %v260
    %1136 = vmatpush.msra.mxu0 %v256
    %1137 = vmatpush.msra.mxu0 %v252
    %1138 = vmatpush.msra.mxu0 %v248
    %1139 = vmatpush.msra.mxu0 %v244
    %1140 = vmatmul.f32.gmra.mxu0 %v1102
    %v1141 = vpop.f32.mrf.mxu0
    %v1142 = vadd.f32 0.0, %v1141
    %1143 = vdwg.mxu0
    %1144 = vmatpush.msra.mxu0 %v305
    %1145 = vmatpush.msra.mxu0 %v301
    %1146 = vmatpush.msra.mxu0 %v297
    %1147 = vmatpush.msra.mxu0 %v293
    %1148 = vmatpush.msra.mxu0 %v289
    %1149 = vmatpush.msra.mxu0 %v285
    %1150 = vmatpush.msra.mxu0 %v281
    %1151 = vmatpush.msra.mxu0 %v277
    %1152 = vmatpush.msra.mxu0 %v273
    %1153 = vmatpush.msra.mxu0 %v269
    %1154 = vmatpush.msra.mxu0 %v265
    %1155 = vmatpush.msra.mxu0 %v261
    %1156 = vmatpush.msra.mxu0 %v257
    %1157 = vmatpush.msra.mxu0 %v253
    %1158 = vmatpush.msra.mxu0 %v249
    %1159 = vmatpush.msra.mxu0 %v245
    %1160 = vmatmul.f32.gmra.mxu0 %v1102
    %v1161 = vpop.f32.mrf.mxu0
    %v1162 = vadd.f32 0.0, %v1161
    %1163 = vdwg.mxu0
    %1164 = vmatpush.msra.mxu0 %v306
    %1165 = vmatpush.msra.mxu0 %v302
    %1166 = vmatpush.msra.mxu0 %v298
    %1167 = vmatpush.msra.mxu0 %v294
    %1168 = vmatpush.msra.mxu0 %v290
    %1169 = vmatpush.msra.mxu0 %v286
    %1170 = vmatpush.msra.mxu0 %v282
    %1171 = vmatpush.msra.mxu0 %v278
    %1172 = vmatpush.msra.mxu0 %v274
    %1173 = vmatpush.msra.mxu0 %v270
    %1174 = vmatpush.msra.mxu0 %v266
    %1175 = vmatpush.msra.mxu0 %v262
    %1176 = vmatpush.msra.mxu0 %v258
    %1177 = vmatpush.msra.mxu0 %v254
    %1178 = vmatpush.msra.mxu0 %v250
    %1179 = vmatpush.msra.mxu0 %v246
    %1180 = vmatmul.f32.gmra.mxu0 %v1102
    %v1181 = vpop.f32.mrf.mxu0
    %v1182 = vadd.f32 0.0, %v1181
    %1183 = vdwg.mxu0
    %v1188 = vrot.slane %v1122, 6
    %v1189 = vrot.slane %v1142, 6
    %v1190 = vrot.slane %v1162, 6
    %v1191 = vrot.slane %v1182, 6
    %v1196 = vadd.f32 %v172, %v1188
    %v1197 = vadd.f32 %v195, %v1189
    %v1198 = vadd.f32 %v218, %v1190
    %v1199 = vadd.f32 %v241, %v1191
    %v1200 = vxor.u32 %v1196, 2147483648
    %v1201 = vmul.f32 %v1200, 1.442695
    %v1202 = vpow.pop %v1201
    %v1203 = vadd.f32 %v1202, 1.0
    %v1204 = vrcp.pop %v1203
    %v1205 = vmul.f32 %v1203, %v1204
    %v1206 = vsub.f32 1.0, %v1205
    %v1207 = vmul.f32 %v1204, %v1206
    %v1208 = vadd.f32 %v1204, %v1207
    %vm1209 = vweird.f32 %v1203
    %vm1210 = vweird.f32 %v1204
    %vm1211 = vmor %vm1209, %vm1210
    %v1212 = vsel %vm1211, %v1204, %v1208
    %v1213 = vand.u32 2147483647, %v1203
    %vm1214 = vcmp.eq.f32.partialorder %v1213, 8.507059e+37
    %v1215 = vand.u32 %v1203, 2147483648
    %v1216 = vor.u32 1.1754944e-38, %v1215
    %v1217 = vsel %vm1214, %v1216, %v1212
    %v1218 = vmul.f32 1.0, %v1217
    %v1219 = vxor.u32 %v1197, 2147483648
    %v1220 = vmul.f32 %v1219, 1.442695
    %v1221 = vpow.pop %v1220
    %v1222 = vadd.f32 %v1221, 1.0
    %v1223 = vrcp.pop %v1222
    %v1224 = vmul.f32 %v1222, %v1223
    %v1225 = vsub.f32 1.0, %v1224
    %v1226 = vmul.f32 %v1223, %v1225
    %v1227 = vadd.f32 %v1223, %v1226
    %vm1228 = vweird.f32 %v1222
    %vm1229 = vweird.f32 %v1223
    %vm1230 = vmor %vm1228, %vm1229
    %v1231 = vsel %vm1230, %v1223, %v1227
    %v1232 = vand.u32 2147483647, %v1222
    %vm1233 = vcmp.eq.f32.partialorder %v1232, 8.507059e+37
    %v1234 = vand.u32 %v1222, 2147483648
    %v1235 = vor.u32 1.1754944e-38, %v1234
    %v1236 = vsel %vm1233, %v1235, %v1231
    %v1237 = vmul.f32 1.0, %v1236
    %v1238 = vtanh.pop %v1198
    %v1239 = vxor.u32 %v1199, 2147483648
    %v1240 = vmul.f32 %v1239, 1.442695
    %v1241 = vpow.pop %v1240
    %v1242 = vadd.f32 %v1241, 1.0
    %v1243 = vrcp.pop %v1242
    %v1244 = vmul.f32 %v1242, %v1243
    %v1245 = vsub.f32 1.0, %v1244
    %v1246 = vmul.f32 %v1243, %v1245
    %v1247 = vadd.f32 %v1243, %v1246
    %vm1248 = vweird.f32 %v1242
    %vm1249 = vweird.f32 %v1243
    %vm1250 = vmor %vm1248, %vm1249
    %v1251 = vsel %vm1250, %v1243, %v1247
    %v1252 = vand.u32 2147483647, %v1242
    %vm1253 = vcmp.eq.f32.partialorder %v1252, 8.507059e+37
    %v1254 = vand.u32 %v1242, 2147483648
    %v1255 = vor.u32 1.1754944e-38, %v1254
    %v1256 = vsel %vm1253, %v1255, %v1251
    %v1257 = vmul.f32 1.0, %v1256
    %v1259 = vrot.slane %v1100, 6
    %v1261 = vmul.f32 %v1237, %v1259
    %v1262 = vmul.f32 %v1218, %v1238
    %v1263 = vadd.f32 %v1261, %v1262
    %v1264 = vtanh.pop %v1263
    %v1265 = vmul.f32 %v1257, %v1264
    %1266 = vst [vmem:[#allocation2 + $0x8] sm:$0xc] %v1265
    %v1268 = vrot.slane %v1265, 2
    %1270 = vmatpush.msra.mxu0 %v303
    %1271 = vmatpush.msra.mxu0 %v299
    %1272 = vmatpush.msra.mxu0 %v295
    %1273 = vmatpush.msra.mxu0 %v291
    %1274 = vmatpush.msra.mxu0 %v287
    %1275 = vmatpush.msra.mxu0 %v283
    %1276 = vmatpush.msra.mxu0 %v279
    %1277 = vmatpush.msra.mxu0 %v275
    %1278 = vmatpush.msra.mxu0 %v271
    %1279 = vmatpush.msra.mxu0 %v267
    %1280 = vmatpush.msra.mxu0 %v263
    %1281 = vmatpush.msra.mxu0 %v259
    %1282 = vmatpush.msra.mxu0 %v255
    %1283 = vmatpush.msra.mxu0 %v251
    %1284 = vmatpush.msra.mxu0 %v247
    %1285 = vmatpush.msra.mxu0 %v243
    %1286 = vmatmul.f32.gmra.mxu0 %v1268
    %v1287 = vpop.f32.mrf.mxu0
    %v1288 = vadd.f32 0.0, %v1287
    %1289 = vdwg.mxu0
    %1290 = vmatpush.msra.mxu0 %v304
    %1291 = vmatpush.msra.mxu0 %v300
    %1292 = vmatpush.msra.mxu0 %v296
    %1293 = vmatpush.msra.mxu0 %v292
    %1294 = vmatpush.msra.mxu0 %v288
    %1295 = vmatpush.msra.mxu0 %v284
    %1296 = vmatpush.msra.mxu0 %v280
    %1297 = vmatpush.msra.mxu0 %v276
    %1298 = vmatpush.msra.mxu0 %v272
    %1299 = vmatpush.msra.mxu0 %v268
    %1300 = vmatpush.msra.mxu0 %v264
    %1301 = vmatpush.msra.mxu0 %v260
    %1302 = vmatpush.msra.mxu0 %v256
    %1303 = vmatpush.msra.mxu0 %v252
    %1304 = vmatpush.msra.mxu0 %v248
    %1305 = vmatpush.msra.mxu0 %v244
    %1306 = vmatmul.f32.gmra.mxu0 %v1268
    %v1307 = vpop.f32.mrf.mxu0
    %v1308 = vadd.f32 0.0, %v1307
    %1309 = vdwg.mxu0
    %1310 = vmatpush.msra.mxu0 %v305
    %1311 = vmatpush.msra.mxu0 %v301
    %1312 = vmatpush.msra.mxu0 %v297
    %1313 = vmatpush.msra.mxu0 %v293
    %1314 = vmatpush.msra.mxu0 %v289
    %1315 = vmatpush.msra.mxu0 %v285
    %1316 = vmatpush.msra.mxu0 %v281
    %1317 = vmatpush.msra.mxu0 %v277
    %1318 = vmatpush.msra.mxu0 %v273
    %1319 = vmatpush.msra.mxu0 %v269
    %1320 = vmatpush.msra.mxu0 %v265
    %1321 = vmatpush.msra.mxu0 %v261
    %1322 = vmatpush.msra.mxu0 %v257
    %1323 = vmatpush.msra.mxu0 %v253
    %1324 = vmatpush.msra.mxu0 %v249
    %1325 = vmatpush.msra.mxu0 %v245
    %1326 = vmatmul.f32.gmra.mxu0 %v1268
    %v1327 = vpop.f32.mrf.mxu0
    %v1328 = vadd.f32 0.0, %v1327
    %1329 = vdwg.mxu0
    %1330 = vmatpush.msra.mxu0 %v306
    %1331 = vmatpush.msra.mxu0 %v302
    %1332 = vmatpush.msra.mxu0 %v298
    %1333 = vmatpush.msra.mxu0 %v294
    %1334 = vmatpush.msra.mxu0 %v290
    %1335 = vmatpush.msra.mxu0 %v286
    %1336 = vmatpush.msra.mxu0 %v282
    %1337 = vmatpush.msra.mxu0 %v278
    %1338 = vmatpush.msra.mxu0 %v274
    %1339 = vmatpush.msra.mxu0 %v270
    %1340 = vmatpush.msra.mxu0 %v266
    %1341 = vmatpush.msra.mxu0 %v262
    %1342 = vmatpush.msra.mxu0 %v258
    %1343 = vmatpush.msra.mxu0 %v254
    %1344 = vmatpush.msra.mxu0 %v250
    %1345 = vmatpush.msra.mxu0 %v246
    %1346 = vmatmul.f32.gmra.mxu0 %v1268
    %v1347 = vpop.f32.mrf.mxu0
    %v1348 = vadd.f32 0.0, %v1347
    %1349 = vdwg.mxu0
    %v1354 = vrot.slane %v1288, 4
    %v1355 = vrot.slane %v1308, 4
    %v1356 = vrot.slane %v1328, 4
    %v1357 = vrot.slane %v1348, 4
    %v1362 = vadd.f32 %v172, %v1354
    %v1363 = vadd.f32 %v195, %v1355
    %v1364 = vadd.f32 %v218, %v1356
    %v1365 = vadd.f32 %v241, %v1357
    %v1366 = vxor.u32 %v1362, 2147483648
    %v1367 = vmul.f32 %v1366, 1.442695
    %v1368 = vpow.pop %v1367
    %v1369 = vadd.f32 %v1368, 1.0
    %v1370 = vrcp.pop %v1369
    %v1371 = vmul.f32 %v1369, %v1370
    %v1372 = vsub.f32 1.0, %v1371
    %v1373 = vmul.f32 %v1370, %v1372
    %v1374 = vadd.f32 %v1370, %v1373
    %vm1375 = vweird.f32 %v1369
    %vm1376 = vweird.f32 %v1370
    %vm1377 = vmor %vm1375, %vm1376
    %v1378 = vsel %vm1377, %v1370, %v1374
    %v1379 = vand.u32 2147483647, %v1369
    %vm1380 = vcmp.eq.f32.partialorder %v1379, 8.507059e+37
    %v1381 = vand.u32 %v1369, 2147483648
    %v1382 = vor.u32 1.1754944e-38, %v1381
    %v1383 = vsel %vm1380, %v1382, %v1378
    %v1384 = vmul.f32 1.0, %v1383
    %v1385 = vxor.u32 %v1363, 2147483648
    %v1386 = vmul.f32 %v1385, 1.442695
    %v1387 = vpow.pop %v1386
    %v1388 = vadd.f32 %v1387, 1.0
    %v1389 = vrcp.pop %v1388
    %v1390 = vmul.f32 %v1388, %v1389
    %v1391 = vsub.f32 1.0, %v1390
    %v1392 = vmul.f32 %v1389, %v1391
    %v1393 = vadd.f32 %v1389, %v1392
    %vm1394 = vweird.f32 %v1388
    %vm1395 = vweird.f32 %v1389
    %vm1396 = vmor %vm1394, %vm1395
    %v1397 = vsel %vm1396, %v1389, %v1393
    %v1398 = vand.u32 2147483647, %v1388
    %vm1399 = vcmp.eq.f32.partialorder %v1398, 8.507059e+37
    %v1400 = vand.u32 %v1388, 2147483648
    %v1401 = vor.u32 1.1754944e-38, %v1400
    %v1402 = vsel %vm1399, %v1401, %v1397
    %v1403 = vmul.f32 1.0, %v1402
    %v1404 = vtanh.pop %v1364
    %v1405 = vxor.u32 %v1365, 2147483648
    %v1406 = vmul.f32 %v1405, 1.442695
    %v1407 = vpow.pop %v1406
    %v1408 = vadd.f32 %v1407, 1.0
    %v1409 = vrcp.pop %v1408
    %v1410 = vmul.f32 %v1408, %v1409
    %v1411 = vsub.f32 1.0, %v1410
    %v1412 = vmul.f32 %v1409, %v1411
    %v1413 = vadd.f32 %v1409, %v1412
    %vm1414 = vweird.f32 %v1408
    %vm1415 = vweird.f32 %v1409
    %vm1416 = vmor %vm1414, %vm1415
    %v1417 = vsel %vm1416, %v1409, %v1413
    %v1418 = vand.u32 2147483647, %v1408
    %vm1419 = vcmp.eq.f32.partialorder %v1418, 8.507059e+37
    %v1420 = vand.u32 %v1408, 2147483648
    %v1421 = vor.u32 1.1754944e-38, %v1420
    %v1422 = vsel %vm1419, %v1421, %v1417
    %v1423 = vmul.f32 1.0, %v1422
    %v1425 = vrot.slane %v1263, 6
    %v1427 = vmul.f32 %v1403, %v1425
    %v1428 = vmul.f32 %v1384, %v1404
    %v1429 = vadd.f32 %v1427, %v1428
    %v1430 = vtanh.pop %v1429
    %v1431 = vmul.f32 %v1423, %v1430
    %1432 = vst [vmem:[#allocation2 + $0x8] sm:$0x30] %v1431
    %v1434 = vrot.slane %v1431, 4
    %1436 = vmatpush.msra.mxu0 %v303
    %1437 = vmatpush.msra.mxu0 %v299
    %1438 = vmatpush.msra.mxu0 %v295
    %1439 = vmatpush.msra.mxu0 %v291
    %1440 = vmatpush.msra.mxu0 %v287
    %1441 = vmatpush.msra.mxu0 %v283
    %1442 = vmatpush.msra.mxu0 %v279
    %1443 = vmatpush.msra.mxu0 %v275
    %1444 = vmatpush.msra.mxu0 %v271
    %1445 = vmatpush.msra.mxu0 %v267
    %1446 = vmatpush.msra.mxu0 %v263
    %1447 = vmatpush.msra.mxu0 %v259
    %1448 = vmatpush.msra.mxu0 %v255
    %1449 = vmatpush.msra.mxu0 %v251
    %1450 = vmatpush.msra.mxu0 %v247
    %1451 = vmatpush.msra.mxu0 %v243
    %1452 = vmatmul.f32.gmra.mxu0 %v1434
    %v1453 = vpop.f32.mrf.mxu0
    %v1454 = vadd.f32 0.0, %v1453
    %1455 = vdwg.mxu0
    %1456 = vmatpush.msra.mxu0 %v304
    %1457 = vmatpush.msra.mxu0 %v300
    %1458 = vmatpush.msra.mxu0 %v296
    %1459 = vmatpush.msra.mxu0 %v292
    %1460 = vmatpush.msra.mxu0 %v288
    %1461 = vmatpush.msra.mxu0 %v284
    %1462 = vmatpush.msra.mxu0 %v280
    %1463 = vmatpush.msra.mxu0 %v276
    %1464 = vmatpush.msra.mxu0 %v272
    %1465 = vmatpush.msra.mxu0 %v268
    %1466 = vmatpush.msra.mxu0 %v264
    %1467 = vmatpush.msra.mxu0 %v260
    %1468 = vmatpush.msra.mxu0 %v256
    %1469 = vmatpush.msra.mxu0 %v252
    %1470 = vmatpush.msra.mxu0 %v248
    %1471 = vmatpush.msra.mxu0 %v244
    %1472 = vmatmul.f32.gmra.mxu0 %v1434
    %v1473 = vpop.f32.mrf.mxu0
    %v1474 = vadd.f32 0.0, %v1473
    %1475 = vdwg.mxu0
    %1476 = vmatpush.msra.mxu0 %v305
    %1477 = vmatpush.msra.mxu0 %v301
    %1478 = vmatpush.msra.mxu0 %v297
    %1479 = vmatpush.msra.mxu0 %v293
    %1480 = vmatpush.msra.mxu0 %v289
    %1481 = vmatpush.msra.mxu0 %v285
    %1482 = vmatpush.msra.mxu0 %v281
    %1483 = vmatpush.msra.mxu0 %v277
    %1484 = vmatpush.msra.mxu0 %v273
    %1485 = vmatpush.msra.mxu0 %v269
    %1486 = vmatpush.msra.mxu0 %v265
    %1487 = vmatpush.msra.mxu0 %v261
    %1488 = vmatpush.msra.mxu0 %v257
    %1489 = vmatpush.msra.mxu0 %v253
    %1490 = vmatpush.msra.mxu0 %v249
    %1491 = vmatpush.msra.mxu0 %v245
    %1492 = vmatmul.f32.gmra.mxu0 %v1434
    %v1493 = vpop.f32.mrf.mxu0
    %v1494 = vadd.f32 0.0, %v1493
    %1495 = vdwg.mxu0
    %1496 = vmatpush.msra.mxu0 %v306
    %1497 = vmatpush.msra.mxu0 %v302
    %1498 = vmatpush.msra.mxu0 %v298
    %1499 = vmatpush.msra.mxu0 %v294
    %1500 = vmatpush.msra.mxu0 %v290
    %1501 = vmatpush.msra.mxu0 %v286
    %1502 = vmatpush.msra.mxu0 %v282
    %1503 = vmatpush.msra.mxu0 %v278
    %1504 = vmatpush.msra.mxu0 %v274
    %1505 = vmatpush.msra.mxu0 %v270
    %1506 = vmatpush.msra.mxu0 %v266
    %1507 = vmatpush.msra.mxu0 %v262
    %1508 = vmatpush.msra.mxu0 %v258
    %1509 = vmatpush.msra.mxu0 %v254
    %1510 = vmatpush.msra.mxu0 %v250
    %1511 = vmatpush.msra.mxu0 %v246
    %1512 = vmatmul.f32.gmra.mxu0 %v1434
    %v1513 = vpop.f32.mrf.mxu0
    %v1514 = vadd.f32 0.0, %v1513
    %1515 = vdwg.mxu0
    %v1520 = vrot.slane %v1454, 2
    %v1521 = vrot.slane %v1474, 2
    %v1522 = vrot.slane %v1494, 2
    %v1523 = vrot.slane %v1514, 2
    %v1528 = vadd.f32 %v172, %v1520
    %v1529 = vadd.f32 %v195, %v1521
    %v1530 = vadd.f32 %v218, %v1522
    %v1531 = vadd.f32 %v241, %v1523
    %v1532 = vxor.u32 %v1528, 2147483648
    %v1533 = vmul.f32 %v1532, 1.442695
    %v1534 = vpow.pop %v1533
    %v1535 = vadd.f32 %v1534, 1.0
    %v1536 = vrcp.pop %v1535
    %v1537 = vmul.f32 %v1535, %v1536
    %v1538 = vsub.f32 1.0, %v1537
    %v1539 = vmul.f32 %v1536, %v1538
    %v1540 = vadd.f32 %v1536, %v1539
    %vm1541 = vweird.f32 %v1535
    %vm1542 = vweird.f32 %v1536
    %vm1543 = vmor %vm1541, %vm1542
    %v1544 = vsel %vm1543, %v1536, %v1540
    %v1545 = vand.u32 2147483647, %v1535
    %vm1546 = vcmp.eq.f32.partialorder %v1545, 8.507059e+37
    %v1547 = vand.u32 %v1535, 2147483648
    %v1548 = vor.u32 1.1754944e-38, %v1547
    %v1549 = vsel %vm1546, %v1548, %v1544
    %v1550 = vmul.f32 1.0, %v1549
    %v1551 = vxor.u32 %v1529, 2147483648
    %v1552 = vmul.f32 %v1551, 1.442695
    %v1553 = vpow.pop %v1552
    %v1554 = vadd.f32 %v1553, 1.0
    %v1555 = vrcp.pop %v1554
    %v1556 = vmul.f32 %v1554, %v1555
    %v1557 = vsub.f32 1.0, %v1556
    %v1558 = vmul.f32 %v1555, %v1557
    %v1559 = vadd.f32 %v1555, %v1558
    %vm1560 = vweird.f32 %v1554
    %vm1561 = vweird.f32 %v1555
    %vm1562 = vmor %vm1560, %vm1561
    %v1563 = vsel %vm1562, %v1555, %v1559
    %v1564 = vand.u32 2147483647, %v1554
    %vm1565 = vcmp.eq.f32.partialorder %v1564, 8.507059e+37
    %v1566 = vand.u32 %v1554, 2147483648
    %v1567 = vor.u32 1.1754944e-38, %v1566
    %v1568 = vsel %vm1565, %v1567, %v1563
    %v1569 = vmul.f32 1.0, %v1568
    %v1570 = vtanh.pop %v1530
    %v1571 = vxor.u32 %v1531, 2147483648
    %v1572 = vmul.f32 %v1571, 1.442695
    %v1573 = vpow.pop %v1572
    %v1574 = vadd.f32 %v1573, 1.0
    %v1575 = vrcp.pop %v1574
    %v1576 = vmul.f32 %v1574, %v1575
    %v1577 = vsub.f32 1.0, %v1576
    %v1578 = vmul.f32 %v1575, %v1577
    %v1579 = vadd.f32 %v1575, %v1578
    %vm1580 = vweird.f32 %v1574
    %vm1581 = vweird.f32 %v1575
    %vm1582 = vmor %vm1580, %vm1581
    %v1583 = vsel %vm1582, %v1575, %v1579
    %v1584 = vand.u32 2147483647, %v1574
    %vm1585 = vcmp.eq.f32.partialorder %v1584, 8.507059e+37
    %v1586 = vand.u32 %v1574, 2147483648
    %v1587 = vor.u32 1.1754944e-38, %v1586
    %v1588 = vsel %vm1585, %v1587, %v1583
    %v1589 = vmul.f32 1.0, %v1588
    %v1591 = vrot.slane %v1429, 6
    %v1593 = vmul.f32 %v1569, %v1591
    %v1594 = vmul.f32 %v1550, %v1570
    %v1595 = vadd.f32 %v1593, %v1594
    %v1596 = vtanh.pop %v1595
    %v1597 = vmul.f32 %v1589, %v1596
    %1598 = vst [vmem:[#allocation2 + $0x8] sm:$0xc0] %v1597
    %v1599 = vld [vmem:[#allocation2] sm:$0xff]
    %v1600 = vld [vmem:[#allocation2 + $0x8] sm:$0xff]
    %v1601 = vld [vmem:[%s6] sm:$0xff]
    %v1602 = vld [vmem:[%s6 + $0x8] sm:$0xff]
    %v1603 = vld [vmem:[%s6 + $0x10] sm:$0xff]
    %v1604 = vld [vmem:[%s6 + $0x18] sm:$0xff]
    %v1605 = vld [vmem:[%s6 + $0x20] sm:$0xff]
    %v1606 = vld [vmem:[%s6 + $0x28] sm:$0xff]
    %v1607 = vld [vmem:[%s6 + $0x30] sm:$0xff]
    %v1608 = vld [vmem:[%s6 + $0x38] sm:$0xff]
    %v1609 = vld [vmem:[%s6 + $0x40] sm:$0xff]
    %v1610 = vld [vmem:[%s6 + $0x48] sm:$0xff]
    %v1611 = vld [vmem:[%s6 + $0x50] sm:$0xff]
    %v1612 = vld [vmem:[%s6 + $0x58] sm:$0xff]
    %v1613 = vld [vmem:[%s6 + $0x60] sm:$0xff]
    %v1614 = vld [vmem:[%s6 + $0x68] sm:$0xff]
    %v1615 = vld [vmem:[%s6 + $0x70] sm:$0xff]
    %v1616 = vld [vmem:[%s6 + $0x78] sm:$0xff]
    %v1617 = vld [vmem:[%s7] sm:$0x1]
    %v1619 = vperm.slane %v1617, 0
    %1621 = vmatpush.msra.mxu0 %v1616
    %1622 = vmatpush.msra.mxu0 %v1615
    %1623 = vmatpush.msra.mxu0 %v1614
    %1624 = vmatpush.msra.mxu0 %v1613
    %1625 = vmatpush.msra.mxu0 %v1612
    %1626 = vmatpush.msra.mxu0 %v1611
    %1627 = vmatpush.msra.mxu0 %v1610
    %1628 = vmatpush.msra.mxu0 %v1609
    %1629 = vmatpush.msra.mxu0 %v1608
    %1630 = vmatpush.msra.mxu0 %v1607
    %1631 = vmatpush.msra.mxu0 %v1606
    %1632 = vmatpush.msra.mxu0 %v1605
    %1633 = vmatpush.msra.mxu0 %v1604
    %1634 = vmatpush.msra.mxu0 %v1603
    %1635 = vmatpush.msra.mxu0 %v1602
    %1636 = vmatpush.msra.mxu0 %v1601
    %1637 = vmatmul.f32.gmra.mxu0 %v1599
    %v1638 = vpop.f32.mrf.mxu0
    %v1639 = vadd.f32 %v1619, %v1638
    %1640 = vmatmul.f32.gmra.mxu0 %v1600
    %v1641 = vpop.f32.mrf.mxu0
    %v1642 = vadd.f32 %v1619, %v1641
    %1643 = vdwg.mxu0
    %v1644 = vmax.f32 %v1639, 0.0
    %v1645 = vmax.f32 %v1642, 0.0
    %v1646 = vld [vmem:[%s8] sm:$0xff]
    %v1647 = vld [vmem:[%s8 + $0x8] sm:$0xff]
    %v1648 = vld [vmem:[%s8 + $0x10] sm:$0xff]
    %v1649 = vld [vmem:[%s8 + $0x18] sm:$0xff]
    %v1650 = vld [vmem:[%s8 + $0x20] sm:$0xff]
    %v1651 = vld [vmem:[%s8 + $0x28] sm:$0xff]
    %v1652 = vld [vmem:[%s8 + $0x30] sm:$0xff]
    %v1653 = vld [vmem:[%s8 + $0x38] sm:$0xff]
    %v1654 = vld [vmem:[%s9] sm:$0x1]
    %v1656 = vperm.slane %v1654, 0
    %v1659 = vsel %vm71, %v1644, 0
    %v1662 = vsel %vm71, %v1645, 0
    %1664 = vmatpush.msra.mxu0 0.0
    %1665 = vmatpush.msra.mxu0 0.0
    %1666 = vmatpush.msra.mxu0 0.0
    %1667 = vmatpush.msra.mxu0 0.0
    %1668 = vmatpush.msra.mxu0 0.0
    %1669 = vmatpush.msra.mxu0 0.0
    %1670 = vmatpush.msra.mxu0 0.0
    %1671 = vmatpush.msra.mxu0 0.0
    %1672 = vmatpush.msra.mxu0 %v1653
    %1673 = vmatpush.msra.mxu0 %v1652
    %1674 = vmatpush.msra.mxu0 %v1651
    %1675 = vmatpush.msra.mxu0 %v1650
    %1676 = vmatpush.msra.mxu0 %v1649
    %1677 = vmatpush.msra.mxu0 %v1648
    %1678 = vmatpush.msra.mxu0 %v1647
    %1679 = vmatpush.msra.mxu0 %v1646
    %1680 = vmatmul.f32.gmra.mxu0 %v1659
    %v1681 = vpop.f32.mrf.mxu0
    %v1682 = vadd.f32 %v1656, %v1681
    %1683 = vmatmul.f32.gmra.mxu0 %v1662
    %v1684 = vpop.f32.mrf.mxu0
    %v1685 = vadd.f32 %v1656, %v1684
    %1686 = vdwg.mxu0
    %v1687 = vmax.f32 %v1682, 0.0
    %v1688 = vmax.f32 %v1685, 0.0
    %v1689 = vld [vmem:[%s10] sm:$0xff]
    %v1690 = vld [vmem:[%s10 + $0x8] sm:$0xff]
    %v1691 = vld [vmem:[%s10 + $0x10] sm:$0xff]
    %v1692 = vld [vmem:[%s10 + $0x18] sm:$0xff]
    %v1693 = vld [vmem:[%s10 + $0x20] sm:$0xff]
    %v1694 = vld [vmem:[%s10 + $0x28] sm:$0xff]
    %v1695 = vld [vmem:[%s10 + $0x30] sm:$0xff]
    %v1696 = vld [vmem:[%s10 + $0x38] sm:$0xff]
    %v1697 = vld [vmem:[%s11] sm:$0x1]
    %v1699 = vperm.slane %v1697, 0
    %v1702 = vsel %vm71, %v1687, 0
    %v1705 = vsel %vm71, %v1688, 0
    %1707 = vmatpush.msra.mxu0 0.0
    %1708 = vmatpush.msra.mxu0 0.0
    %1709 = vmatpush.msra.mxu0 0.0
    %1710 = vmatpush.msra.mxu0 0.0
    %1711 = vmatpush.msra.mxu0 0.0
    %1712 = vmatpush.msra.mxu0 0.0
    %1713 = vmatpush.msra.mxu0 0.0
    %1714 = vmatpush.msra.mxu0 0.0
    %1715 = vmatpush.msra.mxu0 %v1696
    %1716 = vmatpush.msra.mxu0 %v1695
    %1717 = vmatpush.msra.mxu0 %v1694
    %1718 = vmatpush.msra.mxu0 %v1693
    %1719 = vmatpush.msra.mxu0 %v1692
    %1720 = vmatpush.msra.mxu0 %v1691
    %1721 = vmatpush.msra.mxu0 %v1690
    %1722 = vmatpush.msra.mxu0 %v1689
    %1723 = vmatmul.f32.gmra.mxu0 %v1702
    %v1724 = vpop.f32.mrf.mxu0
    %v1725 = vadd.f32 %v1699, %v1724
    %1726 = vmatmul.f32.gmra.mxu0 %v1705
    %v1727 = vpop.f32.mrf.mxu0
    %v1728 = vadd.f32 %v1699, %v1727
    %1729 = vdwg.mxu0
    %v1730 = vmax.f32 %v1725, 0.0
    %v1731 = vmax.f32 %v1728, 0.0
    %1732 = vst [vmem:[%s12] sm:$0xff] %v1730
    %1733 = vst [vmem:[%s12 + $0x8] sm:$0xff] %v1731
    // Predicated region
    $region54: #{player_box_score_lstm_forward.1} parent=1 // pred_check
      _
    $region55: #{player_box_score_lstm_forward.1} parent=1 // pred_check_branch
      %1735 = sbr.rel (0) target = $region57
    $region56: #{player_box_score_lstm_forward.1} parent=1 // pred_region
      _
    $region57: #{player_box_score_lstm_forward.1} parent=1 // pred_fallthru
      _
    // Predicated region
    $region58: #{player_box_score_lstm_forward.1} parent=1 // pred_check
      _
    $region59: #{player_box_score_lstm_forward.1} parent=1 // pred_check_branch
      %1737 = sbr.rel (0) target = $region61
    $region60: #{player_box_score_lstm_forward.1} parent=1 // pred_region
      _
    $region61: #{player_box_score_lstm_forward.1} parent=1 // pred_fallthru
      _
    %1738 = vsyncpa [#allocation4], 1

</llo_original>
